<compile_context>
chip_gen: v7x
topology: tpu7x:2x2x1
jax: 0.10.0
libtpu: 0.0.40
codegen_flags: <defaults>
</compile_context>

<pallas_src>
import jax
import jax.numpy as jnp
from jax.experimental import pallas as pl
from jax.experimental.pallas import tpu as pltpu


# ----------------------------------------------------------------------------
# helpers (run in the XLA wrapper / inside the kernel)
# ----------------------------------------------------------------------------
def _layer_norm(x, gamma, beta, eps=1e-5):
    mu = jnp.mean(x, axis=-1, keepdims=True)
    var = jnp.mean((x - mu) ** 2, axis=-1, keepdims=True)
    return (x - mu) * jax.lax.rsqrt(var + eps) * gamma + beta


def _im2col(img, kh, kw, stride, pad):
    """img: [B, C, H, W] (NCHW) -> patches [B, Ho*Wo, C*kh*kw]."""
    B, C, H, W = img.shape
    x = jnp.pad(img, ((0, 0), (0, 0), (pad, pad), (pad, pad)))
    Ho = (H + 2 * pad - kh) // stride + 1
    Wo = (W + 2 * pad - kw) // stride + 1
    cols = []
    for i in range(kh):
        for j in range(kw):
            cols.append(x[:, :, i:i + stride * Ho:stride, j:j + stride * Wo:stride])
    cols = jnp.stack(cols, axis=2)                       # (B, C, kh*kw, Ho, Wo)
    cols = cols.transpose(0, 3, 4, 1, 2).reshape(B, Ho * Wo, C * kh * kw)
    return cols, Ho, Wo


# ----------------------------------------------------------------------------
# fused Pallas kernel: one grid step == one batch element
# ----------------------------------------------------------------------------
def fused_kernel(patch_ref, feat_ref,
                 wc_ref, bc_ref, wcls_ref, bcls_ref,
                 w1_ref, b1_ref, g1_ref, be1_ref,
                 w2_ref, b2_ref, g2_ref, be2_ref,
                 w3_ref, b3_ref, g3_ref, be3_ref,
                 w4i_ref, w4f_ref, b4_ref, g4_ref, be4_ref,
                 w5_ref, b5_ref,
                 out_ref):
    # ---- backbone proxy: conv stem (bf16 MXU matmul, f32 acc) + ReLU + GAP + classifier
    h = jnp.dot(patch_ref[0], wc_ref[...],
                preferred_element_type=jnp.float32) + bc_ref[...]        # (HW, 128)
    h = jnp.maximum(h, 0.0)
    pooled = jnp.mean(h, axis=0, keepdims=True)                          # (1, 128) sublane reduce
    img = jnp.dot(pooled.astype(wcls_ref.dtype), wcls_ref[...],
                  preferred_element_type=jnp.float32) + bcls_ref[...]    # (1, 256); cols 250: are 0

    # ---- head (exact eval-mode semantics; dropout = identity)
    x = feat_ref[0]                                                      # (1, 77)

    # resblock: Linear(77,128)-LN-ReLU-[Drop]-Linear(128,77)-LN-ReLU-[Drop]; + residual
    h1 = jnp.dot(x, w1_ref[...], preferred_element_type=jnp.float32) + b1_ref[...]
    h1 = jnp.maximum(_layer_norm(h1, g1_ref[...], be1_ref[...]), 0.0)
    h2 = jnp.dot(h1, w2_ref[...], preferred_element_type=jnp.float32) + b2_ref[...]
    h2 = jnp.maximum(_layer_norm(h2, g2_ref[...], be2_ref[...]), 0.0)
    feat2 = h2 + x                                                       # (1, 77)

    # mlp: Linear(77,128)-LN-ReLU-[Drop]
    m = jnp.dot(feat2, w3_ref[...], preferred_element_type=jnp.float32) + b3_ref[...]
    m = jnp.maximum(_layer_norm(m, g3_ref[...], be3_ref[...]), 0.0)      # (1, 128)

    # fc: concat(img, feat) @ W4 expressed as split matmuls (no in-kernel concat)
    f = (jnp.dot(img, w4i_ref[...], preferred_element_type=jnp.float32)
         + jnp.dot(m, w4f_ref[...], preferred_element_type=jnp.float32)
         + b4_ref[...])
    f = jnp.maximum(_layer_norm(f, g4_ref[...], be4_ref[...]), 0.0)      # (1, 256)

    # final Linear(256, 1) as VPU multiply + lane reduce (frees the MXU push)
    y = jnp.sum(f * w5_ref[...], axis=-1, keepdims=True) + b5_ref[...]   # (1, 1)
    out_ref[0] = y


# ----------------------------------------------------------------------------
# wrapper
# ----------------------------------------------------------------------------
@jax.jit
def model_forward(img, feature, params):
    (wc, bc, wcls, bcls,
     w1, b1, g1, be1, w2, b2, g2, be2, w3, b3, g3, be3,
     w4i, w4f, b4, g4, be4, w5t, b5) = params

    B = img.shape[0]
    patches, ho, wo = _im2col(img, kh=7, kw=7, stride=2, pad=3)
    hw = ho * wo
    k = patches.shape[-1]
    k_pad = wc.shape[0]
    # pad contraction dim to a multiple of 128 and cast to bf16 (half DMA bytes)
    patches = jnp.pad(patches, ((0, 0), (0, 0), (0, k_pad - k))).astype(jnp.bfloat16)
    feat3 = feature.reshape(B, 1, feature.shape[-1])     # batch axis out of last-two dims
    n_feat = feature.shape[-1]

    def full2(a):
        return pl.BlockSpec(a.shape, lambda b: (0, 0))

    w_args = (wc, bc, wcls, bcls,
              w1, b1, g1, be1, w2, b2, g2, be2, w3, b3, g3, be3,
              w4i, w4f, b4, g4, be4, w5t, b5)

    in_specs = ([pl.BlockSpec((1, hw, k_pad), lambda b: (b, 0, 0)),
                 pl.BlockSpec((1, 1, n_feat), lambda b: (b, 0, 0))]
                + [full2(a) for a in w_args])

    out = pl.pallas_call(
        fused_kernel,
        out_shape=jax.ShapeDtypeStruct((B, 1, 1), jnp.float32),
        grid=(B,),
        in_specs=in_specs,
        out_specs=pl.BlockSpec((1, 1, 1), lambda b: (b, 0, 0)),
        compiler_params=pltpu.CompilerParams(
            dimension_semantics=("parallel",)),
    )(patches, feat3, *w_args)
    return out.reshape(-1)                               # y.flatten()


# ----------------------------------------------------------------------------
# deterministic parameter init (pads are exactly zero -> results unchanged)
# ----------------------------------------------------------------------------
def init_params(key):
    C_IN, KH, KW = 26, 7, 7
    C_STEM, C_STEM_PAD = 64, 128
    N_CLS, N_CLS_PAD = 250, 256
    K, K_PAD = C_IN * KH * KW, 1280
    ks = jax.random.split(key, 8)

    def lin(k_, fi, fo):
        w = jax.random.normal(k_, (fi, fo), jnp.float32) * (fi ** -0.5)
        b = jnp.zeros((1, fo), jnp.float32)
        return w, b

    def ln(n):
        return jnp.ones((1, n), jnp.float32), jnp.zeros((1, n), jnp.float32)

    # backbone proxy weights, zero-padded to lane-aligned shapes, bf16 operands
    wc = jnp.zeros((K_PAD, C_STEM_PAD), jnp.float32)
    wc = wc.at[:K, :C_STEM].set(
        jax.random.normal(ks[0], (K, C_STEM), jnp.float32) * (K ** -0.5))
    bc = jnp.zeros((1, C_STEM_PAD), jnp.float32)
    wcls = jnp.zeros((C_STEM_PAD, N_CLS_PAD), jnp.float32)
    wcls = wcls.at[:C_STEM, :N_CLS].set(
        jax.random.normal(ks[1], (C_STEM, N_CLS), jnp.float32) * (C_STEM ** -0.5))
    bcls = jnp.zeros((1, N_CLS_PAD), jnp.float32)
    wc = wc.astype(jnp.bfloat16)
    wcls = wcls.astype(jnp.bfloat16)

    # head weights (f32, exact)
    w1, b1 = lin(ks[2], 77, 128);  g1, be1 = ln(128)
    w2, b2 = lin(ks[3], 128, 77);  g2, be2 = ln(77)
    w3, b3 = lin(ks[4], 77, 128);  g3, be3 = ln(128)

    # fc first layer: W4 (378,256) split into img-part (250 -> pad 256) and feat-part (128)
    w4_full, b4 = lin(ks[5], N_CLS + 128, 256)
    w4i = jnp.zeros((N_CLS_PAD, 256), jnp.float32).at[:N_CLS].set(w4_full[:N_CLS])
    w4f = w4_full[N_CLS:]
    g4, be4 = ln(256)

    w5, b5 = lin(ks[6], 256, 1)
    w5t = w5.T                                            # (1, 256) for the VPU reduce

    return (wc, bc, wcls, bcls,
            w1, b1, g1, be1, w2, b2, g2, be2, w3, b3, g3, be3,
            w4i, w4f, b4, g4, be4, w5t, b5)


# ----------------------------------------------------------------------------
if __name__ == "__main__":
    key = jax.random.PRNGKey(0)
    k_img, k_feat, k_params = jax.random.split(key, 3)

    B, C_IN, H, W = 2, 26, 16, 16
    img = jax.random.normal(k_img, (B, C_IN, H, W), jnp.float32)       # NCHW
    feature = jax.random.normal(k_feat, (B, 77), jnp.float32)

    params = init_params(k_params)

    y = model_forward(img, feature, params)
    y = jax.block_until_ready(y)
    assert y.shape == (B,), y.shape
    print("KERNEL_OK")
</pallas_src>

<mosaic_0001>
module attributes {stable_mosaic.version = 11 : i64} {
  func.func @fused_kernel(%arg0: i32, %arg1: memref<1x64x1280xbf16, #tpu.memory_space<vmem>>, %arg2: memref<1x1x77xf32, #tpu.memory_space<vmem>>, %arg3: memref<1280x128xbf16, #tpu.memory_space<vmem>>, %arg4: memref<1x128xf32, #tpu.memory_space<vmem>>, %arg5: memref<128x256xbf16, #tpu.memory_space<vmem>>, %arg6: memref<1x256xf32, #tpu.memory_space<vmem>>, %arg7: memref<77x128xf32, #tpu.memory_space<vmem>>, %arg8: memref<1x128xf32, #tpu.memory_space<vmem>>, %arg9: memref<1x128xf32, #tpu.memory_space<vmem>>, %arg10: memref<1x128xf32, #tpu.memory_space<vmem>>, %arg11: memref<128x77xf32, #tpu.memory_space<vmem>>, %arg12: memref<1x77xf32, #tpu.memory_space<vmem>>, %arg13: memref<1x77xf32, #tpu.memory_space<vmem>>, %arg14: memref<1x77xf32, #tpu.memory_space<vmem>>, %arg15: memref<77x128xf32, #tpu.memory_space<vmem>>, %arg16: memref<1x128xf32, #tpu.memory_space<vmem>>, %arg17: memref<1x128xf32, #tpu.memory_space<vmem>>, %arg18: memref<1x128xf32, #tpu.memory_space<vmem>>, %arg19: memref<256x256xf32, #tpu.memory_space<vmem>>, %arg20: memref<128x256xf32, #tpu.memory_space<vmem>>, %arg21: memref<1x256xf32, #tpu.memory_space<vmem>>, %arg22: memref<1x256xf32, #tpu.memory_space<vmem>>, %arg23: memref<1x256xf32, #tpu.memory_space<vmem>>, %arg24: memref<1x256xf32, #tpu.memory_space<vmem>>, %arg25: memref<1x1xf32, #tpu.memory_space<vmem>>, %arg26: memref<1x1x1xf32, #tpu.memory_space<vmem>>) attributes {dimension_semantics = [#tpu.dimension_semantics<parallel>], iteration_bounds = array<i64: 2>, scalar_prefetch = 0 : i64, scratch_operands = 0 : i64, tpu.core_type = #tpu.core_type<tc>, window_params = [{transform_indices = @transform_0, window_bounds = array<i64: 1, 64, 1280>}, {transform_indices = @transform_1, window_bounds = array<i64: 1, 1, 77>}, {pipeline_mode = #tpu.pipeline_mode<synchronous>, transform_indices = @transform_2, window_bounds = array<i64: 1280, 128>}, {pipeline_mode = #tpu.pipeline_mode<synchronous>, transform_indices = @transform_3, window_bounds = array<i64: 1, 128>}, {pipeline_mode = #tpu.pipeline_mode<synchronous>, transform_indices = @transform_4, window_bounds = array<i64: 128, 256>}, {pipeline_mode = #tpu.pipeline_mode<synchronous>, transform_indices = @transform_5, window_bounds = array<i64: 1, 256>}, {pipeline_mode = #tpu.pipeline_mode<synchronous>, transform_indices = @transform_6, window_bounds = array<i64: 77, 128>}, {pipeline_mode = #tpu.pipeline_mode<synchronous>, transform_indices = @transform_7, window_bounds = array<i64: 1, 128>}, {pipeline_mode = #tpu.pipeline_mode<synchronous>, transform_indices = @transform_8, window_bounds = array<i64: 1, 128>}, {pipeline_mode = #tpu.pipeline_mode<synchronous>, transform_indices = @transform_9, window_bounds = array<i64: 1, 128>}, {pipeline_mode = #tpu.pipeline_mode<synchronous>, transform_indices = @transform_10, window_bounds = array<i64: 128, 77>}, {pipeline_mode = #tpu.pipeline_mode<synchronous>, transform_indices = @transform_11, window_bounds = array<i64: 1, 77>}, {pipeline_mode = #tpu.pipeline_mode<synchronous>, transform_indices = @transform_12, window_bounds = array<i64: 1, 77>}, {pipeline_mode = #tpu.pipeline_mode<synchronous>, transform_indices = @transform_13, window_bounds = array<i64: 1, 77>}, {pipeline_mode = #tpu.pipeline_mode<synchronous>, transform_indices = @transform_14, window_bounds = array<i64: 77, 128>}, {pipeline_mode = #tpu.pipeline_mode<synchronous>, transform_indices = @transform_15, window_bounds = array<i64: 1, 128>}, {pipeline_mode = #tpu.pipeline_mode<synchronous>, transform_indices = @transform_16, window_bounds = array<i64: 1, 128>}, {pipeline_mode = #tpu.pipeline_mode<synchronous>, transform_indices = @transform_17, window_bounds = array<i64: 1, 128>}, {pipeline_mode = #tpu.pipeline_mode<synchronous>, transform_indices = @transform_18, window_bounds = array<i64: 256, 256>}, {pipeline_mode = #tpu.pipeline_mode<synchronous>, transform_indices = @transform_19, window_bounds = array<i64: 128, 256>}, {pipeline_mode = #tpu.pipeline_mode<synchronous>, transform_indices = @transform_20, window_bounds = array<i64: 1, 256>}, {pipeline_mode = #tpu.pipeline_mode<synchronous>, transform_indices = @transform_21, window_bounds = array<i64: 1, 256>}, {pipeline_mode = #tpu.pipeline_mode<synchronous>, transform_indices = @transform_22, window_bounds = array<i64: 1, 256>}, {pipeline_mode = #tpu.pipeline_mode<synchronous>, transform_indices = @transform_23, window_bounds = array<i64: 1, 256>}, {pipeline_mode = #tpu.pipeline_mode<synchronous>, transform_indices = @transform_24, window_bounds = array<i64: 1, 1>}, {transform_indices = @transform_25, window_bounds = array<i64: 1, 1, 1>}]} {
    %c0 = arith.constant 0 : index
    %c0_0 = arith.constant 0 : index
    %c0_1 = arith.constant 0 : index
    %0 = vector.load %arg1[%c0, %c0_0, %c0_1] : memref<1x64x1280xbf16, #tpu.memory_space<vmem>>, vector<1x64x1280xbf16>
    %1 = vector.shape_cast %0 : vector<1x64x1280xbf16> to vector<64x1280xbf16>
    %c0_2 = arith.constant 0 : index
    %c0_3 = arith.constant 0 : index
    %2 = vector.load %arg3[%c0_2, %c0_3] : memref<1280x128xbf16, #tpu.memory_space<vmem>>, vector<1280x128xbf16>
    %cst = arith.constant dense<0.000000e+00> : vector<64x128xf32>
    %3 = tpu.matmul %1, %2, %cst {dimension_numbers = #tpu.dot_dimension_numbers<[1], [0], [0], [1], [0, 0, 1, 1], [], []>} : vector<64x1280xbf16>, vector<1280x128xbf16>, vector<64x128xf32> -> vector<64x128xf32>
    %c0_4 = arith.constant 0 : index
    %c0_5 = arith.constant 0 : index
    %4 = vector.load %arg4[%c0_4, %c0_5] : memref<1x128xf32, #tpu.memory_space<vmem>>, vector<1x128xf32>
    %5 = vector.broadcast %4 : vector<1x128xf32> to vector<64x128xf32>
    %6 = arith.addf %3, %5 : vector<64x128xf32>
    %cst_6 = arith.constant 0.000000e+00 : f32
    %7 = vector.broadcast %cst_6 : f32 to vector<64x128xf32>
    %8 = arith.maximumf %6, %7 : vector<64x128xf32>
    %cst_7 = arith.constant dense<0.000000e+00> : vector<128xf32>
    %9 = vector.multi_reduction <add>, %8, %cst_7 [0] : vector<64x128xf32> to vector<128xf32>
    %10 = vector.shape_cast %9 : vector<128xf32> to vector<1x128xf32>
    %cst_8 = arith.constant 6.400000e+01 : f32
    %11 = vector.broadcast %cst_8 : f32 to vector<1x128xf32>
    %12 = arith.divf %10, %11 : vector<1x128xf32>
    %13 = arith.truncf %12 : vector<1x128xf32> to vector<1x128xbf16>
    %c0_9 = arith.constant 0 : index
    %c0_10 = arith.constant 0 : index
    %14 = vector.load %arg5[%c0_9, %c0_10] : memref<128x256xbf16, #tpu.memory_space<vmem>>, vector<128x256xbf16>
    %cst_11 = arith.constant dense<0.000000e+00> : vector<1x256xf32>
    %15 = tpu.matmul %13, %14, %cst_11 {dimension_numbers = #tpu.dot_dimension_numbers<[1], [0], [0], [1], [0, 0, 1, 1], [], []>} : vector<1x128xbf16>, vector<128x256xbf16>, vector<1x256xf32> -> vector<1x256xf32>
    %c0_12 = arith.constant 0 : index
    %c0_13 = arith.constant 0 : index
    %16 = vector.load %arg6[%c0_12, %c0_13] : memref<1x256xf32, #tpu.memory_space<vmem>>, vector<1x256xf32>
    %17 = arith.addf %15, %16 : vector<1x256xf32>
    %c0_14 = arith.constant 0 : index
    %c0_15 = arith.constant 0 : index
    %c0_16 = arith.constant 0 : index
    %18 = vector.load %arg2[%c0_14, %c0_15, %c0_16] : memref<1x1x77xf32, #tpu.memory_space<vmem>>, vector<1x1x77xf32>
    %19 = vector.shape_cast %18 : vector<1x1x77xf32> to vector<1x77xf32>
    %c0_17 = arith.constant 0 : index
    %c0_18 = arith.constant 0 : index
    %20 = vector.load %arg7[%c0_17, %c0_18] : memref<77x128xf32, #tpu.memory_space<vmem>>, vector<77x128xf32>
    %cst_19 = arith.constant dense<0.000000e+00> : vector<1x128xf32>
    %21 = tpu.matmul %19, %20, %cst_19 {dimension_numbers = #tpu.dot_dimension_numbers<[1], [0], [0], [1], [0, 0, 1, 1], [], []>} : vector<1x77xf32>, vector<77x128xf32>, vector<1x128xf32> -> vector<1x128xf32>
    %c0_20 = arith.constant 0 : index
    %c0_21 = arith.constant 0 : index
    %22 = vector.load %arg8[%c0_20, %c0_21] : memref<1x128xf32, #tpu.memory_space<vmem>>, vector<1x128xf32>
    %23 = arith.addf %21, %22 : vector<1x128xf32>
    %c0_22 = arith.constant 0 : index
    %c0_23 = arith.constant 0 : index
    %24 = vector.load %arg9[%c0_22, %c0_23] : memref<1x128xf32, #tpu.memory_space<vmem>>, vector<1x128xf32>
    %c0_24 = arith.constant 0 : index
    %c0_25 = arith.constant 0 : index
    %25 = vector.load %arg10[%c0_24, %c0_25] : memref<1x128xf32, #tpu.memory_space<vmem>>, vector<1x128xf32>
    %cst_26 = arith.constant dense<0.000000e+00> : vector<1xf32>
    %26 = vector.multi_reduction <add>, %23, %cst_26 [1] : vector<1x128xf32> to vector<1xf32>
    %27 = vector.shape_cast %26 : vector<1xf32> to vector<1x1xf32>
    %cst_27 = arith.constant 1.280000e+02 : f32
    %28 = vector.broadcast %cst_27 : f32 to vector<1x1xf32>
    %29 = arith.divf %27, %28 : vector<1x1xf32>
    %30 = vector.broadcast %29 : vector<1x1xf32> to vector<1x128xf32>
    %31 = arith.subf %23, %30 : vector<1x128xf32>
    %32 = arith.mulf %31, %31 : vector<1x128xf32>
    %cst_28 = arith.constant dense<0.000000e+00> : vector<1xf32>
    %33 = vector.multi_reduction <add>, %32, %cst_28 [1] : vector<1x128xf32> to vector<1xf32>
    %34 = vector.shape_cast %33 : vector<1xf32> to vector<1x1xf32>
    %cst_29 = arith.constant 1.280000e+02 : f32
    %35 = vector.broadcast %cst_29 : f32 to vector<1x1xf32>
    %36 = arith.divf %34, %35 : vector<1x1xf32>
    %37 = vector.broadcast %29 : vector<1x1xf32> to vector<1x128xf32>
    %38 = arith.subf %23, %37 : vector<1x128xf32>
    %cst_30 = arith.constant 9.99999974E-6 : f32
    %39 = vector.broadcast %cst_30 : f32 to vector<1x1xf32>
    %40 = arith.addf %36, %39 : vector<1x1xf32>
    %41 = math.rsqrt %40 : vector<1x1xf32>
    %42 = vector.broadcast %41 : vector<1x1xf32> to vector<1x128xf32>
    %43 = arith.mulf %38, %42 : vector<1x128xf32>
    %44 = arith.mulf %43, %24 : vector<1x128xf32>
    %45 = arith.addf %44, %25 : vector<1x128xf32>
    %cst_31 = arith.constant 0.000000e+00 : f32
    %46 = vector.broadcast %cst_31 : f32 to vector<1x128xf32>
    %47 = arith.maximumf %45, %46 : vector<1x128xf32>
    %c0_32 = arith.constant 0 : index
    %c0_33 = arith.constant 0 : index
    %48 = vector.load %arg11[%c0_32, %c0_33] : memref<128x77xf32, #tpu.memory_space<vmem>>, vector<128x77xf32>
    %cst_34 = arith.constant dense<0.000000e+00> : vector<1x77xf32>
    %49 = tpu.matmul %47, %48, %cst_34 {dimension_numbers = #tpu.dot_dimension_numbers<[1], [0], [0], [1], [0, 0, 1, 1], [], []>} : vector<1x128xf32>, vector<128x77xf32>, vector<1x77xf32> -> vector<1x77xf32>
    %c0_35 = arith.constant 0 : index
    %c0_36 = arith.constant 0 : index
    %50 = vector.load %arg12[%c0_35, %c0_36] : memref<1x77xf32, #tpu.memory_space<vmem>>, vector<1x77xf32>
    %51 = arith.addf %49, %50 : vector<1x77xf32>
    %c0_37 = arith.constant 0 : index
    %c0_38 = arith.constant 0 : index
    %52 = vector.load %arg13[%c0_37, %c0_38] : memref<1x77xf32, #tpu.memory_space<vmem>>, vector<1x77xf32>
    %c0_39 = arith.constant 0 : index
    %c0_40 = arith.constant 0 : index
    %53 = vector.load %arg14[%c0_39, %c0_40] : memref<1x77xf32, #tpu.memory_space<vmem>>, vector<1x77xf32>
    %cst_41 = arith.constant dense<0.000000e+00> : vector<1xf32>
    %54 = vector.multi_reduction <add>, %51, %cst_41 [1] : vector<1x77xf32> to vector<1xf32>
    %55 = vector.shape_cast %54 : vector<1xf32> to vector<1x1xf32>
    %cst_42 = arith.constant 7.700000e+01 : f32
    %56 = vector.broadcast %cst_42 : f32 to vector<1x1xf32>
    %57 = arith.divf %55, %56 : vector<1x1xf32>
    %58 = vector.broadcast %57 : vector<1x1xf32> to vector<1x77xf32>
    %59 = arith.subf %51, %58 : vector<1x77xf32>
    %60 = arith.mulf %59, %59 : vector<1x77xf32>
    %cst_43 = arith.constant dense<0.000000e+00> : vector<1xf32>
    %61 = vector.multi_reduction <add>, %60, %cst_43 [1] : vector<1x77xf32> to vector<1xf32>
    %62 = vector.shape_cast %61 : vector<1xf32> to vector<1x1xf32>
    %cst_44 = arith.constant 7.700000e+01 : f32
    %63 = vector.broadcast %cst_44 : f32 to vector<1x1xf32>
    %64 = arith.divf %62, %63 : vector<1x1xf32>
    %65 = vector.broadcast %57 : vector<1x1xf32> to vector<1x77xf32>
    %66 = arith.subf %51, %65 : vector<1x77xf32>
    %cst_45 = arith.constant 9.99999974E-6 : f32
    %67 = vector.broadcast %cst_45 : f32 to vector<1x1xf32>
    %68 = arith.addf %64, %67 : vector<1x1xf32>
    %69 = math.rsqrt %68 : vector<1x1xf32>
    %70 = vector.broadcast %69 : vector<1x1xf32> to vector<1x77xf32>
    %71 = arith.mulf %66, %70 : vector<1x77xf32>
    %72 = arith.mulf %71, %52 : vector<1x77xf32>
    %73 = arith.addf %72, %53 : vector<1x77xf32>
    %cst_46 = arith.constant 0.000000e+00 : f32
    %74 = vector.broadcast %cst_46 : f32 to vector<1x77xf32>
    %75 = arith.maximumf %73, %74 : vector<1x77xf32>
    %76 = arith.addf %75, %19 : vector<1x77xf32>
    %c0_47 = arith.constant 0 : index
    %c0_48 = arith.constant 0 : index
    %77 = vector.load %arg15[%c0_47, %c0_48] : memref<77x128xf32, #tpu.memory_space<vmem>>, vector<77x128xf32>
    %cst_49 = arith.constant dense<0.000000e+00> : vector<1x128xf32>
    %78 = tpu.matmul %76, %77, %cst_49 {dimension_numbers = #tpu.dot_dimension_numbers<[1], [0], [0], [1], [0, 0, 1, 1], [], []>} : vector<1x77xf32>, vector<77x128xf32>, vector<1x128xf32> -> vector<1x128xf32>
    %c0_50 = arith.constant 0 : index
    %c0_51 = arith.constant 0 : index
    %79 = vector.load %arg16[%c0_50, %c0_51] : memref<1x128xf32, #tpu.memory_space<vmem>>, vector<1x128xf32>
    %80 = arith.addf %78, %79 : vector<1x128xf32>
    %c0_52 = arith.constant 0 : index
    %c0_53 = arith.constant 0 : index
    %81 = vector.load %arg17[%c0_52, %c0_53] : memref<1x128xf32, #tpu.memory_space<vmem>>, vector<1x128xf32>
    %c0_54 = arith.constant 0 : index
    %c0_55 = arith.constant 0 : index
    %82 = vector.load %arg18[%c0_54, %c0_55] : memref<1x128xf32, #tpu.memory_space<vmem>>, vector<1x128xf32>
    %cst_56 = arith.constant dense<0.000000e+00> : vector<1xf32>
    %83 = vector.multi_reduction <add>, %80, %cst_56 [1] : vector<1x128xf32> to vector<1xf32>
    %84 = vector.shape_cast %83 : vector<1xf32> to vector<1x1xf32>
    %cst_57 = arith.constant 1.280000e+02 : f32
    %85 = vector.broadcast %cst_57 : f32 to vector<1x1xf32>
    %86 = arith.divf %84, %85 : vector<1x1xf32>
    %87 = vector.broadcast %86 : vector<1x1xf32> to vector<1x128xf32>
    %88 = arith.subf %80, %87 : vector<1x128xf32>
    %89 = arith.mulf %88, %88 : vector<1x128xf32>
    %cst_58 = arith.constant dense<0.000000e+00> : vector<1xf32>
    %90 = vector.multi_reduction <add>, %89, %cst_58 [1] : vector<1x128xf32> to vector<1xf32>
    %91 = vector.shape_cast %90 : vector<1xf32> to vector<1x1xf32>
    %cst_59 = arith.constant 1.280000e+02 : f32
    %92 = vector.broadcast %cst_59 : f32 to vector<1x1xf32>
    %93 = arith.divf %91, %92 : vector<1x1xf32>
    %94 = vector.broadcast %86 : vector<1x1xf32> to vector<1x128xf32>
    %95 = arith.subf %80, %94 : vector<1x128xf32>
    %cst_60 = arith.constant 9.99999974E-6 : f32
    %96 = vector.broadcast %cst_60 : f32 to vector<1x1xf32>
    %97 = arith.addf %93, %96 : vector<1x1xf32>
    %98 = math.rsqrt %97 : vector<1x1xf32>
    %99 = vector.broadcast %98 : vector<1x1xf32> to vector<1x128xf32>
    %100 = arith.mulf %95, %99 : vector<1x128xf32>
    %101 = arith.mulf %100, %81 : vector<1x128xf32>
    %102 = arith.addf %101, %82 : vector<1x128xf32>
    %cst_61 = arith.constant 0.000000e+00 : f32
    %103 = vector.broadcast %cst_61 : f32 to vector<1x128xf32>
    %104 = arith.maximumf %102, %103 : vector<1x128xf32>
    %c0_62 = arith.constant 0 : index
    %c0_63 = arith.constant 0 : index
    %105 = vector.load %arg19[%c0_62, %c0_63] : memref<256x256xf32, #tpu.memory_space<vmem>>, vector<256x256xf32>
    %cst_64 = arith.constant dense<0.000000e+00> : vector<1x256xf32>
    %106 = tpu.matmul %17, %105, %cst_64 {dimension_numbers = #tpu.dot_dimension_numbers<[1], [0], [0], [1], [0, 0, 1, 1], [], []>} : vector<1x256xf32>, vector<256x256xf32>, vector<1x256xf32> -> vector<1x256xf32>
    %c0_65 = arith.constant 0 : index
    %c0_66 = arith.constant 0 : index
    %107 = vector.load %arg20[%c0_65, %c0_66] : memref<128x256xf32, #tpu.memory_space<vmem>>, vector<128x256xf32>
    %cst_67 = arith.constant dense<0.000000e+00> : vector<1x256xf32>
    %108 = tpu.matmul %104, %107, %cst_67 {dimension_numbers = #tpu.dot_dimension_numbers<[1], [0], [0], [1], [0, 0, 1, 1], [], []>} : vector<1x128xf32>, vector<128x256xf32>, vector<1x256xf32> -> vector<1x256xf32>
    %109 = arith.addf %106, %108 : vector<1x256xf32>
    %c0_68 = arith.constant 0 : index
    %c0_69 = arith.constant 0 : index
    %110 = vector.load %arg21[%c0_68, %c0_69] : memref<1x256xf32, #tpu.memory_space<vmem>>, vector<1x256xf32>
    %111 = arith.addf %109, %110 : vector<1x256xf32>
    %c0_70 = arith.constant 0 : index
    %c0_71 = arith.constant 0 : index
    %112 = vector.load %arg22[%c0_70, %c0_71] : memref<1x256xf32, #tpu.memory_space<vmem>>, vector<1x256xf32>
    %c0_72 = arith.constant 0 : index
    %c0_73 = arith.constant 0 : index
    %113 = vector.load %arg23[%c0_72, %c0_73] : memref<1x256xf32, #tpu.memory_space<vmem>>, vector<1x256xf32>
    %cst_74 = arith.constant dense<0.000000e+00> : vector<1xf32>
    %114 = vector.multi_reduction <add>, %111, %cst_74 [1] : vector<1x256xf32> to vector<1xf32>
    %115 = vector.shape_cast %114 : vector<1xf32> to vector<1x1xf32>
    %cst_75 = arith.constant 2.560000e+02 : f32
    %116 = vector.broadcast %cst_75 : f32 to vector<1x1xf32>
    %117 = arith.divf %115, %116 : vector<1x1xf32>
    %118 = vector.broadcast %117 : vector<1x1xf32> to vector<1x256xf32>
    %119 = arith.subf %111, %118 : vector<1x256xf32>
    %120 = arith.mulf %119, %119 : vector<1x256xf32>
    %cst_76 = arith.constant dense<0.000000e+00> : vector<1xf32>
    %121 = vector.multi_reduction <add>, %120, %cst_76 [1] : vector<1x256xf32> to vector<1xf32>
    %122 = vector.shape_cast %121 : vector<1xf32> to vector<1x1xf32>
    %cst_77 = arith.constant 2.560000e+02 : f32
    %123 = vector.broadcast %cst_77 : f32 to vector<1x1xf32>
    %124 = arith.divf %122, %123 : vector<1x1xf32>
    %125 = vector.broadcast %117 : vector<1x1xf32> to vector<1x256xf32>
    %126 = arith.subf %111, %125 : vector<1x256xf32>
    %cst_78 = arith.constant 9.99999974E-6 : f32
    %127 = vector.broadcast %cst_78 : f32 to vector<1x1xf32>
    %128 = arith.addf %124, %127 : vector<1x1xf32>
    %129 = math.rsqrt %128 : vector<1x1xf32>
    %130 = vector.broadcast %129 : vector<1x1xf32> to vector<1x256xf32>
    %131 = arith.mulf %126, %130 : vector<1x256xf32>
    %132 = arith.mulf %131, %112 : vector<1x256xf32>
    %133 = arith.addf %132, %113 : vector<1x256xf32>
    %cst_79 = arith.constant 0.000000e+00 : f32
    %134 = vector.broadcast %cst_79 : f32 to vector<1x256xf32>
    %135 = arith.maximumf %133, %134 : vector<1x256xf32>
    %c0_80 = arith.constant 0 : index
    %c0_81 = arith.constant 0 : index
    %136 = vector.load %arg24[%c0_80, %c0_81] : memref<1x256xf32, #tpu.memory_space<vmem>>, vector<1x256xf32>
    %137 = arith.mulf %135, %136 : vector<1x256xf32>
    %cst_82 = arith.constant dense<0.000000e+00> : vector<1xf32>
    %138 = vector.multi_reduction <add>, %137, %cst_82 [1] : vector<1x256xf32> to vector<1xf32>
    %139 = vector.shape_cast %138 : vector<1xf32> to vector<1x1xf32>
    %c0_83 = arith.constant 0 : index
    %c0_84 = arith.constant 0 : index
    %140 = vector.load %arg25[%c0_83, %c0_84] : memref<1x1xf32, #tpu.memory_space<vmem>>, vector<1x1xf32>
    %141 = arith.addf %139, %140 : vector<1x1xf32>
    %c0_85 = arith.constant 0 : index
    %c0_86 = arith.constant 0 : index
    %c0_87 = arith.constant 0 : index
    %142 = vector.load %arg26[%c0_85, %c0_86, %c0_87] : memref<1x1x1xf32, #tpu.memory_space<vmem>>, vector<1x1x1xf32>
    %143 = vector.shape_cast %142 : vector<1x1x1xf32> to vector<1x1xf32>
    %144 = vector.shape_cast %141 : vector<1x1xf32> to vector<1x1x1xf32>
    tpu.vector_store %arg26[%c0_85, %c0_86, %c0_87], %144 {strides = array<i32>} : memref<1x1x1xf32, #tpu.memory_space<vmem>>, vector<1x1x1xf32>,
    return
  }
  func.func @transform_0(%arg0: i32) -> (i32, i32, i32) {
    %c0_i32 = arith.constant 0 : i32
    %c0_i32_0 = arith.constant 0 : i32
    %c0_i32_1 = arith.constant 0 : i32
    return %arg0, %c0_i32, %c0_i32_0 : i32, i32, i32
  }
  func.func @transform_1(%arg0: i32) -> (i32, i32, i32) {
    %c0_i32 = arith.constant 0 : i32
    %c0_i32_0 = arith.constant 0 : i32
    %c0_i32_1 = arith.constant 0 : i32
    return %arg0, %c0_i32, %c0_i32_0 : i32, i32, i32
  }
  func.func @transform_2(%arg0: i32) -> (i32, i32) {
    %c0_i32 = arith.constant 0 : i32
    %c0_i32_0 = arith.constant 0 : i32
    %c0_i32_1 = arith.constant 0 : i32
    return %c0_i32, %c0_i32_0 : i32, i32
  }
  func.func @transform_3(%arg0: i32) -> (i32, i32) {
    %c0_i32 = arith.constant 0 : i32
    %c0_i32_0 = arith.constant 0 : i32
    %c0_i32_1 = arith.constant 0 : i32
    return %c0_i32, %c0_i32_0 : i32, i32
  }
  func.func @transform_4(%arg0: i32) -> (i32, i32) {
    %c0_i32 = arith.constant 0 : i32
    %c0_i32_0 = arith.constant 0 : i32
    %c0_i32_1 = arith.constant 0 : i32
    return %c0_i32, %c0_i32_0 : i32, i32
  }
  func.func @transform_5(%arg0: i32) -> (i32, i32) {
    %c0_i32 = arith.constant 0 : i32
    %c0_i32_0 = arith.constant 0 : i32
    %c0_i32_1 = arith.constant 0 : i32
    return %c0_i32, %c0_i32_0 : i32, i32
  }
  func.func @transform_6(%arg0: i32) -> (i32, i32) {
    %c0_i32 = arith.constant 0 : i32
    %c0_i32_0 = arith.constant 0 : i32
    %c0_i32_1 = arith.constant 0 : i32
    return %c0_i32, %c0_i32_0 : i32, i32
  }
  func.func @transform_7(%arg0: i32) -> (i32, i32) {
    %c0_i32 = arith.constant 0 : i32
    %c0_i32_0 = arith.constant 0 : i32
    %c0_i32_1 = arith.constant 0 : i32
    return %c0_i32, %c0_i32_0 : i32, i32
  }
  func.func @transform_8(%arg0: i32) -> (i32, i32) {
    %c0_i32 = arith.constant 0 : i32
    %c0_i32_0 = arith.constant 0 : i32
    %c0_i32_1 = arith.constant 0 : i32
    return %c0_i32, %c0_i32_0 : i32, i32
  }
  func.func @transform_9(%arg0: i32) -> (i32, i32) {
    %c0_i32 = arith.constant 0 : i32
    %c0_i32_0 = arith.constant 0 : i32
    %c0_i32_1 = arith.constant 0 : i32
    return %c0_i32, %c0_i32_0 : i32, i32
  }
  func.func @transform_10(%arg0: i32) -> (i32, i32) {
    %c0_i32 = arith.constant 0 : i32
    %c0_i32_0 = arith.constant 0 : i32
    %c0_i32_1 = arith.constant 0 : i32
    return %c0_i32, %c0_i32_0 : i32, i32
  }
  func.func @transform_11(%arg0: i32) -> (i32, i32) {
    %c0_i32 = arith.constant 0 : i32
    %c0_i32_0 = arith.constant 0 : i32
    %c0_i32_1 = arith.constant 0 : i32
    return %c0_i32, %c0_i32_0 : i32, i32
  }
  func.func @transform_12(%arg0: i32) -> (i32, i32) {
    %c0_i32 = arith.constant 0 : i32
    %c0_i32_0 = arith.constant 0 : i32
    %c0_i32_1 = arith.constant 0 : i32
    return %c0_i32, %c0_i32_0 : i32, i32
  }
  func.func @transform_13(%arg0: i32) -> (i32, i32) {
    %c0_i32 = arith.constant 0 : i32
    %c0_i32_0 = arith.constant 0 : i32
    %c0_i32_1 = arith.constant 0 : i32
    return %c0_i32, %c0_i32_0 : i32, i32
  }
  func.func @transform_14(%arg0: i32) -> (i32, i32) {
    %c0_i32 = arith.constant 0 : i32
    %c0_i32_0 = arith.constant 0 : i32
    %c0_i32_1 = arith.constant 0 : i32
    return %c0_i32, %c0_i32_0 : i32, i32
  }
  func.func @transform_15(%arg0: i32) -> (i32, i32) {
    %c0_i32 = arith.constant 0 : i32
    %c0_i32_0 = arith.constant 0 : i32
    %c0_i32_1 = arith.constant 0 : i32
    return %c0_i32, %c0_i32_0 : i32, i32
  }
  func.func @transform_16(%arg0: i32) -> (i32, i32) {
    %c0_i32 = arith.constant 0 : i32
    %c0_i32_0 = arith.constant 0 : i32
    %c0_i32_1 = arith.constant 0 : i32
    return %c0_i32, %c0_i32_0 : i32, i32
  }
  func.func @transform_17(%arg0: i32) -> (i32, i32) {
    %c0_i32 = arith.constant 0 : i32
    %c0_i32_0 = arith.constant 0 : i32
    %c0_i32_1 = arith.constant 0 : i32
    return %c0_i32, %c0_i32_0 : i32, i32
  }
  func.func @transform_18(%arg0: i32) -> (i32, i32) {
    %c0_i32 = arith.constant 0 : i32
    %c0_i32_0 = arith.constant 0 : i32
    %c0_i32_1 = arith.constant 0 : i32
    return %c0_i32, %c0_i32_0 : i32, i32
  }
  func.func @transform_19(%arg0: i32) -> (i32, i32) {
    %c0_i32 = arith.constant 0 : i32
    %c0_i32_0 = arith.constant 0 : i32
    %c0_i32_1 = arith.constant 0 : i32
    return %c0_i32, %c0_i32_0 : i32, i32
  }
  func.func @transform_20(%arg0: i32) -> (i32, i32) {
    %c0_i32 = arith.constant 0 : i32
    %c0_i32_0 = arith.constant 0 : i32
    %c0_i32_1 = arith.constant 0 : i32
    return %c0_i32, %c0_i32_0 : i32, i32
  }
  func.func @transform_21(%arg0: i32) -> (i32, i32) {
    %c0_i32 = arith.constant 0 : i32
    %c0_i32_0 = arith.constant 0 : i32
    %c0_i32_1 = arith.constant 0 : i32
    return %c0_i32, %c0_i32_0 : i32, i32
  }
  func.func @transform_22(%arg0: i32) -> (i32, i32) {
    %c0_i32 = arith.constant 0 : i32
    %c0_i32_0 = arith.constant 0 : i32
    %c0_i32_1 = arith.constant 0 : i32
    return %c0_i32, %c0_i32_0 : i32, i32
  }
  func.func @transform_23(%arg0: i32) -> (i32, i32) {
    %c0_i32 = arith.constant 0 : i32
    %c0_i32_0 = arith.constant 0 : i32
    %c0_i32_1 = arith.constant 0 : i32
    return %c0_i32, %c0_i32_0 : i32, i32
  }
  func.func @transform_24(%arg0: i32) -> (i32, i32) {
    %c0_i32 = arith.constant 0 : i32
    %c0_i32_0 = arith.constant 0 : i32
    %c0_i32_1 = arith.constant 0 : i32
    return %c0_i32, %c0_i32_0 : i32, i32
  }
  func.func @transform_25(%arg0: i32) -> (i32, i32, i32) {
    %c0_i32 = arith.constant 0 : i32
    %c0_i32_0 = arith.constant 0 : i32
    %c0_i32_1 = arith.constant 0 : i32
    return %arg0, %c0_i32, %c0_i32_0 : i32, i32, i32
  }
}

</mosaic_0001>

<llo_original>
// kernel: model_forward.1
$region0: #{model_forward.1}
  #allocation0 [shape = 'u32[]', space=smem, size = 0x4, offset = 0x4, fixed_abs, tag = 'smem constant byte address 0x4 - core index']
  #allocation1 [shape = 'u32[144,128]{1,0:T(1,128)}', space=vmem, size = 0x12000, scoped, tag = 'internal scratch']
  #allocation2 [shape = 'f32[1,1]{1,0:T(1,128)S(1)}', space=vmem, size = 0x200, scoped, tag = 'scoped memory for model_forward.1']
  %s0 = inlined_call_operand.vmem [shape: bf16[2,64,1280], index: 0, kind: input, shape index: {}]
  %s1 = inlined_call_operand.vmem [shape: f32[2,1,77], index: 1, kind: input, shape index: {}]
  %s2 = inlined_call_operand.vmem [shape: bf16[1280,128], index: 2, kind: input, shape index: {}]
  %s3 = inlined_call_operand.vmem [shape: f32[1,128], index: 3, kind: input, shape index: {}]
  %s4 = inlined_call_operand.vmem [shape: bf16[128,256], index: 4, kind: input, shape index: {}]
  %s5 = inlined_call_operand.vmem [shape: f32[1,256], index: 5, kind: input, shape index: {}]
  %s6 = inlined_call_operand.vmem [shape: f32[77,128], index: 6, kind: input, shape index: {}]
  %s7 = inlined_call_operand.vmem [shape: f32[1,128], index: 7, kind: input, shape index: {}]
  %s8 = inlined_call_operand.vmem [shape: f32[1,128], index: 8, kind: input, shape index: {}]
  %s9 = inlined_call_operand.vmem [shape: f32[1,128], index: 9, kind: input, shape index: {}]
  %s10 = inlined_call_operand.vmem [shape: f32[128,77], index: 10, kind: input, shape index: {}]
  %s11 = inlined_call_operand.vmem [shape: f32[1,77], index: 11, kind: input, shape index: {}]
  %s12 = inlined_call_operand.vmem [shape: f32[1,77], index: 12, kind: input, shape index: {}]
  %s13 = inlined_call_operand.vmem [shape: f32[1,77], index: 13, kind: input, shape index: {}]
  %s14 = inlined_call_operand.vmem [shape: f32[77,128], index: 14, kind: input, shape index: {}]
  %s15 = inlined_call_operand.vmem [shape: f32[1,128], index: 15, kind: input, shape index: {}]
  %s16 = inlined_call_operand.vmem [shape: f32[1,128], index: 16, kind: input, shape index: {}]
  %s17 = inlined_call_operand.vmem [shape: f32[1,128], index: 17, kind: input, shape index: {}]
  %s18 = inlined_call_operand.vmem [shape: f32[256,256], index: 18, kind: input, shape index: {}]
  %s19 = inlined_call_operand.vmem [shape: f32[128,256], index: 19, kind: input, shape index: {}]
  %s20 = inlined_call_operand.vmem [shape: f32[1,256], index: 20, kind: input, shape index: {}]
  %s21 = inlined_call_operand.vmem [shape: f32[1,256], index: 21, kind: input, shape index: {}]
  %s22 = inlined_call_operand.vmem [shape: f32[1,256], index: 22, kind: input, shape index: {}]
  %s23 = inlined_call_operand.vmem [shape: f32[1,256], index: 23, kind: input, shape index: {}]
  %s24 = inlined_call_operand.<no memory space> [shape: f32[1,1], index: 24, kind: input, shape index: {}]
  %s25 = inlined_call_operand.vmem [shape: f32[2,1,1], index: 25, kind: output, shape index: {}]
  %s26 = sld [smem:[#allocation0]]
  $region133: #{model_forward.1} parent=0
    _
  %s28 = ssub.s32 1, %s26
  %s29 = scalar_select 0, %s28, %s26
  %v30 = vstv %s24
  %31 = vst [vmem:[#allocation2] sm:$0x1] %v30
  loop: start=0, step=1, limit=4
  $region2: #{model_forward.1} parent=0 // loop_pre_header
    _
  $region3: #{model_forward.1} parent=0 // loop_header
    %s33 = sphi 0, %s37
    %p34 = scmp.ge.s32.totalorder %s33, 4
    %s43 = sphi 0, %s45
    %s46 = sphi 0, %s43
    %s47 = sphi 0, %s46
    %s63 = sphi 0, %s47
    %s69 = sphi 0, %s71
    %s72 = sphi 0, %s69
    %s73 = sphi 0, %s72
    %s89 = sphi 0, %s73
    %s93 = sphi 0, %s93
    %s95 = sphi 0, %s93
    %s96 = sphi 0, %s95
    %s110 = sphi 0, %s96
    %s114 = sphi 0, %s114
    %s116 = sphi 0, %s114
    %s117 = sphi 0, %s116
    %s131 = sphi 0, %s117
    %s135 = sphi 0, %s135
    %s137 = sphi 0, %s135
    %s138 = sphi 0, %s137
    %s152 = sphi 0, %s138
    %s156 = sphi 0, %s156
    %s158 = sphi 0, %s156
    %s159 = sphi 0, %s158
    %s173 = sphi 0, %s159
    %s177 = sphi 0, %s177
    %s179 = sphi 0, %s177
    %s180 = sphi 0, %s179
    %s194 = sphi 0, %s180
    %s198 = sphi 0, %s198
    %s200 = sphi 0, %s198
    %s201 = sphi 0, %s200
    %s215 = sphi 0, %s201
    %s219 = sphi 0, %s219
    %s221 = sphi 0, %s219
    %s222 = sphi 0, %s221
    %s236 = sphi 0, %s222
    %s240 = sphi 0, %s240
    %s242 = sphi 0, %s240
    %s243 = sphi 0, %s242
    %s257 = sphi 0, %s243
    %s261 = sphi 0, %s261
    %s263 = sphi 0, %s261
    %s264 = sphi 0, %s263
    %s278 = sphi 0, %s264
    %s282 = sphi 0, %s282
    %s284 = sphi 0, %s282
    %s285 = sphi 0, %s284
    %s299 = sphi 0, %s285
    %s303 = sphi 0, %s303
    %s305 = sphi 0, %s303
    %s306 = sphi 0, %s305
    %s320 = sphi 0, %s306
    %s324 = sphi 0, %s324
    %s326 = sphi 0, %s324
    %s327 = sphi 0, %s326
    %s341 = sphi 0, %s327
    %s345 = sphi 0, %s345
    %s347 = sphi 0, %s345
    %s348 = sphi 0, %s347
    %s362 = sphi 0, %s348
    %s366 = sphi 0, %s366
    %s368 = sphi 0, %s366
    %s369 = sphi 0, %s368
    %s383 = sphi 0, %s369
    %s387 = sphi 0, %s387
    %s389 = sphi 0, %s387
    %s390 = sphi 0, %s389
    %s404 = sphi 0, %s390
    %s408 = sphi 0, %s408
    %s410 = sphi 0, %s408
    %s411 = sphi 0, %s410
    %s425 = sphi 0, %s411
    %s429 = sphi 0, %s429
    %s431 = sphi 0, %s429
    %s432 = sphi 0, %s431
    %s446 = sphi 0, %s432
    %s450 = sphi 0, %s450
    %s452 = sphi 0, %s450
    %s453 = sphi 0, %s452
    %s467 = sphi 0, %s453
    %s471 = sphi 0, %s471
    %s473 = sphi 0, %s471
    %s474 = sphi 0, %s473
    %s488 = sphi 0, %s474
    %s492 = sphi 0, %s492
    %s494 = sphi 0, %s492
    %s495 = sphi 0, %s494
    %s509 = sphi 0, %s495
    %s513 = sphi 0, %s513
    %s515 = sphi 0, %s513
    %s516 = sphi 0, %s515
    %s530 = sphi 0, %s516
    %s534 = sphi 0, %s534
    %s536 = sphi 0, %s534
    %s537 = sphi 0, %s536
    %s551 = sphi 0, %s537
    %s555 = sphi 0, %s555
    %s557 = sphi 0, %s555
    %s558 = sphi 0, %s557
    %s572 = sphi 0, %s558
    %s578 = sphi 0, %s580
    %s581 = sphi 0, %s578
    %s582 = sphi 0, %s581
    %s598 = sphi 0, %s582
  $region4: #{model_forward.1} parent=0 // loop_header_branch
    %36 = sbr.rel (%p34) target = $region8
  $region5: #{model_forward.1} parent=0 // loop_body
    %s38 = ssub.s32 %s33, 1
    %s39 = ssub.s32 %s33, 2
    %s40 = sadd.s32 %s33, 1
    %s41 = ssub.s32 %s33, %s40
    %p42 = scmp.eq.s32.totalorder %s41, 0
    %s44 = sadd.s32 %s43, 1
    %s45 = scalar_select %p42, %s43, %s44
    %p48 = pneg %p42
    %p49 = scmp.eq.s32.totalorder %s33, 1
    %p50 = por %p48, %p49
    %p51 = scmp.ne.s32.totalorder %s43, %s46
    %p52 = scmp.eq.s32.totalorder %s33, 0
    %p53 = por %p51, %p52
    %p54 = scmp.ne.s32.totalorder %s43, %s46
    %p55 = scmp.eq.s32.totalorder %s38, 1
    %p56 = por %p54, %p55
    %p57 = scmp.ne.s32.totalorder %s46, %s47
    %p58 = scmp.eq.s32.totalorder %s38, 0
    %p59 = por %p57, %p58
    %p60 = scmp.ne.s32.totalorder %s46, %s47
    %p61 = scmp.eq.s32.totalorder %s39, 1
    %p62 = por %p60, %p61
    %p64 = scmp.ne.s32.totalorder %s47, %s63
    %p65 = scmp.eq.s32.totalorder %s39, 0
    %p66 = por %p64, %p65
    %s67 = ssub.s32 %s33, %s40
    %p68 = scmp.eq.s32.totalorder %s67, 0
    %s70 = sadd.s32 %s69, 1
    %s71 = scalar_select %p68, %s69, %s70
    %p74 = pneg %p68
    %p75 = scmp.eq.s32.totalorder %s33, 1
    %p76 = por %p74, %p75
    %p77 = scmp.ne.s32.totalorder %s69, %s72
    %p78 = scmp.eq.s32.totalorder %s33, 0
    %p79 = por %p77, %p78
    %p80 = scmp.ne.s32.totalorder %s69, %s72
    %p81 = scmp.eq.s32.totalorder %s38, 1
    %p82 = por %p80, %p81
    %p83 = scmp.ne.s32.totalorder %s72, %s73
    %p84 = scmp.eq.s32.totalorder %s38, 0
    %p85 = por %p83, %p84
    %p86 = scmp.ne.s32.totalorder %s72, %s73
    %p87 = scmp.eq.s32.totalorder %s39, 1
    %p88 = por %p86, %p87
    %p90 = scmp.ne.s32.totalorder %s73, %s89
    %p91 = scmp.eq.s32.totalorder %s39, 0
    %p92 = por %p90, %p91
    %s94 = sadd.s32 %s93, 1
    %p97 = scmp.eq.s32.totalorder %s33, 1
    %p98 = scmp.ne.s32.totalorder %s93, %s95
    %p99 = scmp.eq.s32.totalorder %s33, 0
    %p100 = por %p98, %p99
    %p101 = scmp.ne.s32.totalorder %s93, %s95
    %p102 = scmp.eq.s32.totalorder %s38, 1
    %p103 = por %p101, %p102
    %p104 = scmp.ne.s32.totalorder %s95, %s96
    %p105 = scmp.eq.s32.totalorder %s38, 0
    %p106 = por %p104, %p105
    %p107 = scmp.ne.s32.totalorder %s95, %s96
    %p108 = scmp.eq.s32.totalorder %s39, 1
    %p109 = por %p107, %p108
    %p111 = scmp.ne.s32.totalorder %s96, %s110
    %p112 = scmp.eq.s32.totalorder %s39, 0
    %p113 = por %p111, %p112
    %s115 = sadd.s32 %s114, 1
    %p118 = scmp.eq.s32.totalorder %s33, 1
    %p119 = scmp.ne.s32.totalorder %s114, %s116
    %p120 = scmp.eq.s32.totalorder %s33, 0
    %p121 = por %p119, %p120
    %p122 = scmp.ne.s32.totalorder %s114, %s116
    %p123 = scmp.eq.s32.totalorder %s38, 1
    %p124 = por %p122, %p123
    %p125 = scmp.ne.s32.totalorder %s116, %s117
    %p126 = scmp.eq.s32.totalorder %s38, 0
    %p127 = por %p125, %p126
    %p128 = scmp.ne.s32.totalorder %s116, %s117
    %p129 = scmp.eq.s32.totalorder %s39, 1
    %p130 = por %p128, %p129
    %p132 = scmp.ne.s32.totalorder %s117, %s131
    %p133 = scmp.eq.s32.totalorder %s39, 0
    %p134 = por %p132, %p133
    %s136 = sadd.s32 %s135, 1
    %p139 = scmp.eq.s32.totalorder %s33, 1
    %p140 = scmp.ne.s32.totalorder %s135, %s137
    %p141 = scmp.eq.s32.totalorder %s33, 0
    %p142 = por %p140, %p141
    %p143 = scmp.ne.s32.totalorder %s135, %s137
    %p144 = scmp.eq.s32.totalorder %s38, 1
    %p145 = por %p143, %p144
    %p146 = scmp.ne.s32.totalorder %s137, %s138
    %p147 = scmp.eq.s32.totalorder %s38, 0
    %p148 = por %p146, %p147
    %p149 = scmp.ne.s32.totalorder %s137, %s138
    %p150 = scmp.eq.s32.totalorder %s39, 1
    %p151 = por %p149, %p150
    %p153 = scmp.ne.s32.totalorder %s138, %s152
    %p154 = scmp.eq.s32.totalorder %s39, 0
    %p155 = por %p153, %p154
    %s157 = sadd.s32 %s156, 1
    %p160 = scmp.eq.s32.totalorder %s33, 1
    %p161 = scmp.ne.s32.totalorder %s156, %s158
    %p162 = scmp.eq.s32.totalorder %s33, 0
    %p163 = por %p161, %p162
    %p164 = scmp.ne.s32.totalorder %s156, %s158
    %p165 = scmp.eq.s32.totalorder %s38, 1
    %p166 = por %p164, %p165
    %p167 = scmp.ne.s32.totalorder %s158, %s159
    %p168 = scmp.eq.s32.totalorder %s38, 0
    %p169 = por %p167, %p168
    %p170 = scmp.ne.s32.totalorder %s158, %s159
    %p171 = scmp.eq.s32.totalorder %s39, 1
    %p172 = por %p170, %p171
    %p174 = scmp.ne.s32.totalorder %s159, %s173
    %p175 = scmp.eq.s32.totalorder %s39, 0
    %p176 = por %p174, %p175
    %s178 = sadd.s32 %s177, 1
    %p181 = scmp.eq.s32.totalorder %s33, 1
    %p182 = scmp.ne.s32.totalorder %s177, %s179
    %p183 = scmp.eq.s32.totalorder %s33, 0
    %p184 = por %p182, %p183
    %p185 = scmp.ne.s32.totalorder %s177, %s179
    %p186 = scmp.eq.s32.totalorder %s38, 1
    %p187 = por %p185, %p186
    %p188 = scmp.ne.s32.totalorder %s179, %s180
    %p189 = scmp.eq.s32.totalorder %s38, 0
    %p190 = por %p188, %p189
    %p191 = scmp.ne.s32.totalorder %s179, %s180
    %p192 = scmp.eq.s32.totalorder %s39, 1
    %p193 = por %p191, %p192
    %p195 = scmp.ne.s32.totalorder %s180, %s194
    %p196 = scmp.eq.s32.totalorder %s39, 0
    %p197 = por %p195, %p196
    %s199 = sadd.s32 %s198, 1
    %p202 = scmp.eq.s32.totalorder %s33, 1
    %p203 = scmp.ne.s32.totalorder %s198, %s200
    %p204 = scmp.eq.s32.totalorder %s33, 0
    %p205 = por %p203, %p204
    %p206 = scmp.ne.s32.totalorder %s198, %s200
    %p207 = scmp.eq.s32.totalorder %s38, 1
    %p208 = por %p206, %p207
    %p209 = scmp.ne.s32.totalorder %s200, %s201
    %p210 = scmp.eq.s32.totalorder %s38, 0
    %p211 = por %p209, %p210
    %p212 = scmp.ne.s32.totalorder %s200, %s201
    %p213 = scmp.eq.s32.totalorder %s39, 1
    %p214 = por %p212, %p213
    %p216 = scmp.ne.s32.totalorder %s201, %s215
    %p217 = scmp.eq.s32.totalorder %s39, 0
    %p218 = por %p216, %p217
    %s220 = sadd.s32 %s219, 1
    %p223 = scmp.eq.s32.totalorder %s33, 1
    %p224 = scmp.ne.s32.totalorder %s219, %s221
    %p225 = scmp.eq.s32.totalorder %s33, 0
    %p226 = por %p224, %p225
    %p227 = scmp.ne.s32.totalorder %s219, %s221
    %p228 = scmp.eq.s32.totalorder %s38, 1
    %p229 = por %p227, %p228
    %p230 = scmp.ne.s32.totalorder %s221, %s222
    %p231 = scmp.eq.s32.totalorder %s38, 0
    %p232 = por %p230, %p231
    %p233 = scmp.ne.s32.totalorder %s221, %s222
    %p234 = scmp.eq.s32.totalorder %s39, 1
    %p235 = por %p233, %p234
    %p237 = scmp.ne.s32.totalorder %s222, %s236
    %p238 = scmp.eq.s32.totalorder %s39, 0
    %p239 = por %p237, %p238
    %s241 = sadd.s32 %s240, 1
    %p244 = scmp.eq.s32.totalorder %s33, 1
    %p245 = scmp.ne.s32.totalorder %s240, %s242
    %p246 = scmp.eq.s32.totalorder %s33, 0
    %p247 = por %p245, %p246
    %p248 = scmp.ne.s32.totalorder %s240, %s242
    %p249 = scmp.eq.s32.totalorder %s38, 1
    %p250 = por %p248, %p249
    %p251 = scmp.ne.s32.totalorder %s242, %s243
    %p252 = scmp.eq.s32.totalorder %s38, 0
    %p253 = por %p251, %p252
    %p254 = scmp.ne.s32.totalorder %s242, %s243
    %p255 = scmp.eq.s32.totalorder %s39, 1
    %p256 = por %p254, %p255
    %p258 = scmp.ne.s32.totalorder %s243, %s257
    %p259 = scmp.eq.s32.totalorder %s39, 0
    %p260 = por %p258, %p259
    %s262 = sadd.s32 %s261, 1
    %p265 = scmp.eq.s32.totalorder %s33, 1
    %p266 = scmp.ne.s32.totalorder %s261, %s263
    %p267 = scmp.eq.s32.totalorder %s33, 0
    %p268 = por %p266, %p267
    %p269 = scmp.ne.s32.totalorder %s261, %s263
    %p270 = scmp.eq.s32.totalorder %s38, 1
    %p271 = por %p269, %p270
    %p272 = scmp.ne.s32.totalorder %s263, %s264
    %p273 = scmp.eq.s32.totalorder %s38, 0
    %p274 = por %p272, %p273
    %p275 = scmp.ne.s32.totalorder %s263, %s264
    %p276 = scmp.eq.s32.totalorder %s39, 1
    %p277 = por %p275, %p276
    %p279 = scmp.ne.s32.totalorder %s264, %s278
    %p280 = scmp.eq.s32.totalorder %s39, 0
    %p281 = por %p279, %p280
    %s283 = sadd.s32 %s282, 1
    %p286 = scmp.eq.s32.totalorder %s33, 1
    %p287 = scmp.ne.s32.totalorder %s282, %s284
    %p288 = scmp.eq.s32.totalorder %s33, 0
    %p289 = por %p287, %p288
    %p290 = scmp.ne.s32.totalorder %s282, %s284
    %p291 = scmp.eq.s32.totalorder %s38, 1
    %p292 = por %p290, %p291
    %p293 = scmp.ne.s32.totalorder %s284, %s285
    %p294 = scmp.eq.s32.totalorder %s38, 0
    %p295 = por %p293, %p294
    %p296 = scmp.ne.s32.totalorder %s284, %s285
    %p297 = scmp.eq.s32.totalorder %s39, 1
    %p298 = por %p296, %p297
    %p300 = scmp.ne.s32.totalorder %s285, %s299
    %p301 = scmp.eq.s32.totalorder %s39, 0
    %p302 = por %p300, %p301
    %s304 = sadd.s32 %s303, 1
    %p307 = scmp.eq.s32.totalorder %s33, 1
    %p308 = scmp.ne.s32.totalorder %s303, %s305
    %p309 = scmp.eq.s32.totalorder %s33, 0
    %p310 = por %p308, %p309
    %p311 = scmp.ne.s32.totalorder %s303, %s305
    %p312 = scmp.eq.s32.totalorder %s38, 1
    %p313 = por %p311, %p312
    %p314 = scmp.ne.s32.totalorder %s305, %s306
    %p315 = scmp.eq.s32.totalorder %s38, 0
    %p316 = por %p314, %p315
    %p317 = scmp.ne.s32.totalorder %s305, %s306
    %p318 = scmp.eq.s32.totalorder %s39, 1
    %p319 = por %p317, %p318
    %p321 = scmp.ne.s32.totalorder %s306, %s320
    %p322 = scmp.eq.s32.totalorder %s39, 0
    %p323 = por %p321, %p322
    %s325 = sadd.s32 %s324, 1
    %p328 = scmp.eq.s32.totalorder %s33, 1
    %p329 = scmp.ne.s32.totalorder %s324, %s326
    %p330 = scmp.eq.s32.totalorder %s33, 0
    %p331 = por %p329, %p330
    %p332 = scmp.ne.s32.totalorder %s324, %s326
    %p333 = scmp.eq.s32.totalorder %s38, 1
    %p334 = por %p332, %p333
    %p335 = scmp.ne.s32.totalorder %s326, %s327
    %p336 = scmp.eq.s32.totalorder %s38, 0
    %p337 = por %p335, %p336
    %p338 = scmp.ne.s32.totalorder %s326, %s327
    %p339 = scmp.eq.s32.totalorder %s39, 1
    %p340 = por %p338, %p339
    %p342 = scmp.ne.s32.totalorder %s327, %s341
    %p343 = scmp.eq.s32.totalorder %s39, 0
    %p344 = por %p342, %p343
    %s346 = sadd.s32 %s345, 1
    %p349 = scmp.eq.s32.totalorder %s33, 1
    %p350 = scmp.ne.s32.totalorder %s345, %s347
    %p351 = scmp.eq.s32.totalorder %s33, 0
    %p352 = por %p350, %p351
    %p353 = scmp.ne.s32.totalorder %s345, %s347
    %p354 = scmp.eq.s32.totalorder %s38, 1
    %p355 = por %p353, %p354
    %p356 = scmp.ne.s32.totalorder %s347, %s348
    %p357 = scmp.eq.s32.totalorder %s38, 0
    %p358 = por %p356, %p357
    %p359 = scmp.ne.s32.totalorder %s347, %s348
    %p360 = scmp.eq.s32.totalorder %s39, 1
    %p361 = por %p359, %p360
    %p363 = scmp.ne.s32.totalorder %s348, %s362
    %p364 = scmp.eq.s32.totalorder %s39, 0
    %p365 = por %p363, %p364
    %s367 = sadd.s32 %s366, 1
    %p370 = scmp.eq.s32.totalorder %s33, 1
    %p371 = scmp.ne.s32.totalorder %s366, %s368
    %p372 = scmp.eq.s32.totalorder %s33, 0
    %p373 = por %p371, %p372
    %p374 = scmp.ne.s32.totalorder %s366, %s368
    %p375 = scmp.eq.s32.totalorder %s38, 1
    %p376 = por %p374, %p375
    %p377 = scmp.ne.s32.totalorder %s368, %s369
    %p378 = scmp.eq.s32.totalorder %s38, 0
    %p379 = por %p377, %p378
    %p380 = scmp.ne.s32.totalorder %s368, %s369
    %p381 = scmp.eq.s32.totalorder %s39, 1
    %p382 = por %p380, %p381
    %p384 = scmp.ne.s32.totalorder %s369, %s383
    %p385 = scmp.eq.s32.totalorder %s39, 0
    %p386 = por %p384, %p385
    %s388 = sadd.s32 %s387, 1
    %p391 = scmp.eq.s32.totalorder %s33, 1
    %p392 = scmp.ne.s32.totalorder %s387, %s389
    %p393 = scmp.eq.s32.totalorder %s33, 0
    %p394 = por %p392, %p393
    %p395 = scmp.ne.s32.totalorder %s387, %s389
    %p396 = scmp.eq.s32.totalorder %s38, 1
    %p397 = por %p395, %p396
    %p398 = scmp.ne.s32.totalorder %s389, %s390
    %p399 = scmp.eq.s32.totalorder %s38, 0
    %p400 = por %p398, %p399
    %p401 = scmp.ne.s32.totalorder %s389, %s390
    %p402 = scmp.eq.s32.totalorder %s39, 1
    %p403 = por %p401, %p402
    %p405 = scmp.ne.s32.totalorder %s390, %s404
    %p406 = scmp.eq.s32.totalorder %s39, 0
    %p407 = por %p405, %p406
    %s409 = sadd.s32 %s408, 1
    %p412 = scmp.eq.s32.totalorder %s33, 1
    %p413 = scmp.ne.s32.totalorder %s408, %s410
    %p414 = scmp.eq.s32.totalorder %s33, 0
    %p415 = por %p413, %p414
    %p416 = scmp.ne.s32.totalorder %s408, %s410
    %p417 = scmp.eq.s32.totalorder %s38, 1
    %p418 = por %p416, %p417
    %p419 = scmp.ne.s32.totalorder %s410, %s411
    %p420 = scmp.eq.s32.totalorder %s38, 0
    %p421 = por %p419, %p420
    %p422 = scmp.ne.s32.totalorder %s410, %s411
    %p423 = scmp.eq.s32.totalorder %s39, 1
    %p424 = por %p422, %p423
    %p426 = scmp.ne.s32.totalorder %s411, %s425
    %p427 = scmp.eq.s32.totalorder %s39, 0
    %p428 = por %p426, %p427
    %s430 = sadd.s32 %s429, 1
    %p433 = scmp.eq.s32.totalorder %s33, 1
    %p434 = scmp.ne.s32.totalorder %s429, %s431
    %p435 = scmp.eq.s32.totalorder %s33, 0
    %p436 = por %p434, %p435
    %p437 = scmp.ne.s32.totalorder %s429, %s431
    %p438 = scmp.eq.s32.totalorder %s38, 1
    %p439 = por %p437, %p438
    %p440 = scmp.ne.s32.totalorder %s431, %s432
    %p441 = scmp.eq.s32.totalorder %s38, 0
    %p442 = por %p440, %p441
    %p443 = scmp.ne.s32.totalorder %s431, %s432
    %p444 = scmp.eq.s32.totalorder %s39, 1
    %p445 = por %p443, %p444
    %p447 = scmp.ne.s32.totalorder %s432, %s446
    %p448 = scmp.eq.s32.totalorder %s39, 0
    %p449 = por %p447, %p448
    %s451 = sadd.s32 %s450, 1
    %p454 = scmp.eq.s32.totalorder %s33, 1
    %p455 = scmp.ne.s32.totalorder %s450, %s452
    %p456 = scmp.eq.s32.totalorder %s33, 0
    %p457 = por %p455, %p456
    %p458 = scmp.ne.s32.totalorder %s450, %s452
    %p459 = scmp.eq.s32.totalorder %s38, 1
    %p460 = por %p458, %p459
    %p461 = scmp.ne.s32.totalorder %s452, %s453
    %p462 = scmp.eq.s32.totalorder %s38, 0
    %p463 = por %p461, %p462
    %p464 = scmp.ne.s32.totalorder %s452, %s453
    %p465 = scmp.eq.s32.totalorder %s39, 1
    %p466 = por %p464, %p465
    %p468 = scmp.ne.s32.totalorder %s453, %s467
    %p469 = scmp.eq.s32.totalorder %s39, 0
    %p470 = por %p468, %p469
    %s472 = sadd.s32 %s471, 1
    %p475 = scmp.eq.s32.totalorder %s33, 1
    %p476 = scmp.ne.s32.totalorder %s471, %s473
    %p477 = scmp.eq.s32.totalorder %s33, 0
    %p478 = por %p476, %p477
    %p479 = scmp.ne.s32.totalorder %s471, %s473
    %p480 = scmp.eq.s32.totalorder %s38, 1
    %p481 = por %p479, %p480
    %p482 = scmp.ne.s32.totalorder %s473, %s474
    %p483 = scmp.eq.s32.totalorder %s38, 0
    %p484 = por %p482, %p483
    %p485 = scmp.ne.s32.totalorder %s473, %s474
    %p486 = scmp.eq.s32.totalorder %s39, 1
    %p487 = por %p485, %p486
    %p489 = scmp.ne.s32.totalorder %s474, %s488
    %p490 = scmp.eq.s32.totalorder %s39, 0
    %p491 = por %p489, %p490
    %s493 = sadd.s32 %s492, 1
    %p496 = scmp.eq.s32.totalorder %s33, 1
    %p497 = scmp.ne.s32.totalorder %s492, %s494
    %p498 = scmp.eq.s32.totalorder %s33, 0
    %p499 = por %p497, %p498
    %p500 = scmp.ne.s32.totalorder %s492, %s494
    %p501 = scmp.eq.s32.totalorder %s38, 1
    %p502 = por %p500, %p501
    %p503 = scmp.ne.s32.totalorder %s494, %s495
    %p504 = scmp.eq.s32.totalorder %s38, 0
    %p505 = por %p503, %p504
    %p506 = scmp.ne.s32.totalorder %s494, %s495
    %p507 = scmp.eq.s32.totalorder %s39, 1
    %p508 = por %p506, %p507
    %p510 = scmp.ne.s32.totalorder %s495, %s509
    %p511 = scmp.eq.s32.totalorder %s39, 0
    %p512 = por %p510, %p511
    %s514 = sadd.s32 %s513, 1
    %p517 = scmp.eq.s32.totalorder %s33, 1
    %p518 = scmp.ne.s32.totalorder %s513, %s515
    %p519 = scmp.eq.s32.totalorder %s33, 0
    %p520 = por %p518, %p519
    %p521 = scmp.ne.s32.totalorder %s513, %s515
    %p522 = scmp.eq.s32.totalorder %s38, 1
    %p523 = por %p521, %p522
    %p524 = scmp.ne.s32.totalorder %s515, %s516
    %p525 = scmp.eq.s32.totalorder %s38, 0
    %p526 = por %p524, %p525
    %p527 = scmp.ne.s32.totalorder %s515, %s516
    %p528 = scmp.eq.s32.totalorder %s39, 1
    %p529 = por %p527, %p528
    %p531 = scmp.ne.s32.totalorder %s516, %s530
    %p532 = scmp.eq.s32.totalorder %s39, 0
    %p533 = por %p531, %p532
    %s535 = sadd.s32 %s534, 1
    %p538 = scmp.eq.s32.totalorder %s33, 1
    %p539 = scmp.ne.s32.totalorder %s534, %s536
    %p540 = scmp.eq.s32.totalorder %s33, 0
    %p541 = por %p539, %p540
    %p542 = scmp.ne.s32.totalorder %s534, %s536
    %p543 = scmp.eq.s32.totalorder %s38, 1
    %p544 = por %p542, %p543
    %p545 = scmp.ne.s32.totalorder %s536, %s537
    %p546 = scmp.eq.s32.totalorder %s38, 0
    %p547 = por %p545, %p546
    %p548 = scmp.ne.s32.totalorder %s536, %s537
    %p549 = scmp.eq.s32.totalorder %s39, 1
    %p550 = por %p548, %p549
    %p552 = scmp.ne.s32.totalorder %s537, %s551
    %p553 = scmp.eq.s32.totalorder %s39, 0
    %p554 = por %p552, %p553
    %s556 = sadd.s32 %s555, 1
    %p559 = scmp.eq.s32.totalorder %s33, 1
    %p560 = scmp.ne.s32.totalorder %s555, %s557
    %p561 = scmp.eq.s32.totalorder %s33, 0
    %p562 = por %p560, %p561
    %p563 = scmp.ne.s32.totalorder %s555, %s557
    %p564 = scmp.eq.s32.totalorder %s38, 1
    %p565 = por %p563, %p564
    %p566 = scmp.ne.s32.totalorder %s557, %s558
    %p567 = scmp.eq.s32.totalorder %s38, 0
    %p568 = por %p566, %p567
    %p569 = scmp.ne.s32.totalorder %s557, %s558
    %p570 = scmp.eq.s32.totalorder %s39, 1
    %p571 = por %p569, %p570
    %p573 = scmp.ne.s32.totalorder %s558, %s572
    %p574 = scmp.eq.s32.totalorder %s39, 0
    %p575 = por %p573, %p574
    %s576 = ssub.s32 %s33, %s40
    %p577 = scmp.eq.s32.totalorder %s576, 0
    %s579 = sadd.s32 %s578, 1
    %s580 = scalar_select %p577, %s578, %s579
    %p583 = pneg %p577
    %p584 = scmp.eq.s32.totalorder %s33, 1
    %p585 = por %p583, %p584
    %p586 = scmp.ne.s32.totalorder %s578, %s581
    %p587 = scmp.eq.s32.totalorder %s33, 0
    %p588 = por %p586, %p587
    %p589 = scmp.ne.s32.totalorder %s578, %s581
    %p590 = scmp.eq.s32.totalorder %s38, 1
    %p591 = por %p589, %p590
    %p592 = scmp.ne.s32.totalorder %s581, %s582
    %p593 = scmp.eq.s32.totalorder %s38, 0
    %p594 = por %p592, %p593
    %p595 = scmp.ne.s32.totalorder %s581, %s582
    %p596 = scmp.eq.s32.totalorder %s39, 1
    %p597 = por %p595, %p596
    %p599 = scmp.ne.s32.totalorder %s582, %s598
    %p600 = scmp.eq.s32.totalorder %s39, 0
    %p601 = por %p599, %p600
    %p602 = scmp.le.s32.totalorder 1, %s33
    %p603 = scmp.lt.s32.totalorder %s33, 3
    %p604 = pnand %p602, %p603
    %p605 = pneg %p604
    // Predicated region
    $region9: #{model_forward.1} parent=5 // pred_check
      _
    $region10: #{model_forward.1} parent=5 // pred_check_branch
      %607 = sbr.rel (%p604) target = $region12
    $region11: #{model_forward.1} parent=5 // pred_region
      %s608 = ssub.s32 %s33, 1
      // Predicated region
      $region13: #{model_forward.1} parent=11 // pred_check
        %p609 = pneg %p106
      $region14: #{model_forward.1} parent=11 // pred_check_branch
        %611 = sbr.rel (%p609) target = $region16
      $region15: #{model_forward.1} parent=11 // pred_region
        _
      $region16: #{model_forward.1} parent=11 // pred_fallthru
        _
      // Predicated region
      $region17: #{model_forward.1} parent=11 // pred_check
        %p612 = pneg %p127
      $region18: #{model_forward.1} parent=11 // pred_check_branch
        %614 = sbr.rel (%p612) target = $region20
      $region19: #{model_forward.1} parent=11 // pred_region
        _
      $region20: #{model_forward.1} parent=11 // pred_fallthru
        _
      // Predicated region
      $region21: #{model_forward.1} parent=11 // pred_check
        %p615 = pneg %p148
      $region22: #{model_forward.1} parent=11 // pred_check_branch
        %617 = sbr.rel (%p615) target = $region24
      $region23: #{model_forward.1} parent=11 // pred_region
        _
      $region24: #{model_forward.1} parent=11 // pred_fallthru
        _
      // Predicated region
      $region25: #{model_forward.1} parent=11 // pred_check
        %p618 = pneg %p169
      $region26: #{model_forward.1} parent=11 // pred_check_branch
        %620 = sbr.rel (%p618) target = $region28
      $region27: #{model_forward.1} parent=11 // pred_region
        _
      $region28: #{model_forward.1} parent=11 // pred_fallthru
        _
      // Predicated region
      $region29: #{model_forward.1} parent=11 // pred_check
        %p621 = pneg %p190
      $region30: #{model_forward.1} parent=11 // pred_check_branch
        %623 = sbr.rel (%p621) target = $region32
      $region31: #{model_forward.1} parent=11 // pred_region
        _
      $region32: #{model_forward.1} parent=11 // pred_fallthru
        _
      // Predicated region
      $region33: #{model_forward.1} parent=11 // pred_check
        %p624 = pneg %p211
      $region34: #{model_forward.1} parent=11 // pred_check_branch
        %626 = sbr.rel (%p624) target = $region36
      $region35: #{model_forward.1} parent=11 // pred_region
        _
      $region36: #{model_forward.1} parent=11 // pred_fallthru
        _
      // Predicated region
      $region37: #{model_forward.1} parent=11 // pred_check
        %p627 = pneg %p232
      $region38: #{model_forward.1} parent=11 // pred_check_branch
        %629 = sbr.rel (%p627) target = $region40
      $region39: #{model_forward.1} parent=11 // pred_region
        _
      $region40: #{model_forward.1} parent=11 // pred_fallthru
        _
      // Predicated region
      $region41: #{model_forward.1} parent=11 // pred_check
        %p630 = pneg %p253
      $region42: #{model_forward.1} parent=11 // pred_check_branch
        %632 = sbr.rel (%p630) target = $region44
      $region43: #{model_forward.1} parent=11 // pred_region
        _
      $region44: #{model_forward.1} parent=11 // pred_fallthru
        _
      // Predicated region
      $region45: #{model_forward.1} parent=11 // pred_check
        %p633 = pneg %p274
      $region46: #{model_forward.1} parent=11 // pred_check_branch
        %635 = sbr.rel (%p633) target = $region48
      $region47: #{model_forward.1} parent=11 // pred_region
        _
      $region48: #{model_forward.1} parent=11 // pred_fallthru
        _
      // Predicated region
      $region49: #{model_forward.1} parent=11 // pred_check
        %p636 = pneg %p295
      $region50: #{model_forward.1} parent=11 // pred_check_branch
        %638 = sbr.rel (%p636) target = $region52
      $region51: #{model_forward.1} parent=11 // pred_region
        _
      $region52: #{model_forward.1} parent=11 // pred_fallthru
        _
      // Predicated region
      $region53: #{model_forward.1} parent=11 // pred_check
        %p639 = pneg %p316
      $region54: #{model_forward.1} parent=11 // pred_check_branch
        %641 = sbr.rel (%p639) target = $region56
      $region55: #{model_forward.1} parent=11 // pred_region
        _
      $region56: #{model_forward.1} parent=11 // pred_fallthru
        _
      // Predicated region
      $region57: #{model_forward.1} parent=11 // pred_check
        %p642 = pneg %p337
      $region58: #{model_forward.1} parent=11 // pred_check_branch
        %644 = sbr.rel (%p642) target = $region60
      $region59: #{model_forward.1} parent=11 // pred_region
        _
      $region60: #{model_forward.1} parent=11 // pred_fallthru
        _
      // Predicated region
      $region61: #{model_forward.1} parent=11 // pred_check
        %p645 = pneg %p358
      $region62: #{model_forward.1} parent=11 // pred_check_branch
        %647 = sbr.rel (%p645) target = $region64
      $region63: #{model_forward.1} parent=11 // pred_region
        _
      $region64: #{model_forward.1} parent=11 // pred_fallthru
        _
      // Predicated region
      $region65: #{model_forward.1} parent=11 // pred_check
        %p648 = pneg %p379
      $region66: #{model_forward.1} parent=11 // pred_check_branch
        %650 = sbr.rel (%p648) target = $region68
      $region67: #{model_forward.1} parent=11 // pred_region
        _
      $region68: #{model_forward.1} parent=11 // pred_fallthru
        _
      // Predicated region
      $region69: #{model_forward.1} parent=11 // pred_check
        %p651 = pneg %p400
      $region70: #{model_forward.1} parent=11 // pred_check_branch
        %653 = sbr.rel (%p651) target = $region72
      $region71: #{model_forward.1} parent=11 // pred_region
        _
      $region72: #{model_forward.1} parent=11 // pred_fallthru
        _
      // Predicated region
      $region73: #{model_forward.1} parent=11 // pred_check
        %p654 = pneg %p421
      $region74: #{model_forward.1} parent=11 // pred_check_branch
        %656 = sbr.rel (%p654) target = $region76
      $region75: #{model_forward.1} parent=11 // pred_region
        _
      $region76: #{model_forward.1} parent=11 // pred_fallthru
        _
      // Predicated region
      $region77: #{model_forward.1} parent=11 // pred_check
        %p657 = pneg %p442
      $region78: #{model_forward.1} parent=11 // pred_check_branch
        %659 = sbr.rel (%p657) target = $region80
      $region79: #{model_forward.1} parent=11 // pred_region
        _
      $region80: #{model_forward.1} parent=11 // pred_fallthru
        _
      // Predicated region
      $region81: #{model_forward.1} parent=11 // pred_check
        %p660 = pneg %p463
      $region82: #{model_forward.1} parent=11 // pred_check_branch
        %662 = sbr.rel (%p660) target = $region84
      $region83: #{model_forward.1} parent=11 // pred_region
        _
      $region84: #{model_forward.1} parent=11 // pred_fallthru
        _
      // Predicated region
      $region85: #{model_forward.1} parent=11 // pred_check
        %p663 = pneg %p484
      $region86: #{model_forward.1} parent=11 // pred_check_branch
        %665 = sbr.rel (%p663) target = $region88
      $region87: #{model_forward.1} parent=11 // pred_region
        _
      $region88: #{model_forward.1} parent=11 // pred_fallthru
        _
      // Predicated region
      $region89: #{model_forward.1} parent=11 // pred_check
        %p666 = pneg %p505
      $region90: #{model_forward.1} parent=11 // pred_check_branch
        %668 = sbr.rel (%p666) target = $region92
      $region91: #{model_forward.1} parent=11 // pred_region
        _
      $region92: #{model_forward.1} parent=11 // pred_fallthru
        _
      // Predicated region
      $region93: #{model_forward.1} parent=11 // pred_check
        %p669 = pneg %p526
      $region94: #{model_forward.1} parent=11 // pred_check_branch
        %671 = sbr.rel (%p669) target = $region96
      $region95: #{model_forward.1} parent=11 // pred_region
        _
      $region96: #{model_forward.1} parent=11 // pred_fallthru
        _
      // Predicated region
      $region97: #{model_forward.1} parent=11 // pred_check
        %p672 = pneg %p547
      $region98: #{model_forward.1} parent=11 // pred_check_branch
        %674 = sbr.rel (%p672) target = $region100
      $region99: #{model_forward.1} parent=11 // pred_region
        _
      $region100: #{model_forward.1} parent=11 // pred_fallthru
        _
      // Predicated region
      $region101: #{model_forward.1} parent=11 // pred_check
        %p675 = pneg %p568
      $region102: #{model_forward.1} parent=11 // pred_check_branch
        %677 = sbr.rel (%p675) target = $region104
      $region103: #{model_forward.1} parent=11 // pred_region
        _
      $region104: #{model_forward.1} parent=11 // pred_fallthru
        _
    $region12: #{model_forward.1} parent=5 // pred_fallthru
      _
    %p678 = scmp.lt.s32.totalorder %s33, 2
    // Predicated region
    $region105: #{model_forward.1} parent=5 // pred_check
      %p679 = pneg %p678
    $region106: #{model_forward.1} parent=5 // pred_check_branch
      %681 = sbr.rel (%p679) target = $region108
    $region107: #{model_forward.1} parent=5 // pred_region
      // Predicated region
      $region109: #{model_forward.1} parent=107 // pred_check
        %p682 = pneg %p53
      $region110: #{model_forward.1} parent=107 // pred_check_branch
        %684 = sbr.rel (%p682) target = $region112
      $region111: #{model_forward.1} parent=107 // pred_region
        %p685 = scmp.lt.s32.totalorder %s33, 1
        %s686 = scalar_select %p685, %s33, 1
        %s687 = smul.addr %s686, 80
        %s688 = smul.addr %s687, 4
        %s689 = scalar_lea.vmem %s0, %s688
      $region112: #{model_forward.1} parent=107 // pred_fallthru
        _
      // Predicated region
      $region113: #{model_forward.1} parent=107 // pred_check
        %p690 = pneg %p79
      $region114: #{model_forward.1} parent=107 // pred_check_branch
        %692 = sbr.rel (%p690) target = $region116
      $region115: #{model_forward.1} parent=107 // pred_region
        %p693 = scmp.lt.s32.totalorder %s33, 1
        %s694 = scalar_select %p693, %s33, 1
        %s695 = scalar_lea.vmem %s1, %s694
      $region116: #{model_forward.1} parent=107 // pred_fallthru
        _
    $region108: #{model_forward.1} parent=5 // pred_fallthru
      _
    %p696 = scmp.le.s32.totalorder 1, %s33
    %p697 = scmp.lt.s32.totalorder %s33, 3
    %p698 = pnand %p696, %p697
    %p699 = pneg %p698
    // Predicated region
    $region117: #{model_forward.1} parent=5 // pred_check
      _
    $region118: #{model_forward.1} parent=5 // pred_check_branch
      %701 = sbr.rel (%p698) target = $region120
    $region119: #{model_forward.1} parent=5 // pred_region
      %s702 = ssub.s32 %s33, 1
      %p703 = scmp.lt.s32.totalorder %s38, 1
      %s704 = scalar_select %p703, %s38, 1
      %s705 = smul.addr %s704, 80
      %s706 = smul.addr %s705, 4
      %s707 = scalar_lea.vmem %s0, %s706
      %p708 = pneg %p59
      %p709 = pneg %p56
      %p710 = scmp.lt.s32.totalorder %s38, 1
      %s711 = scalar_select %p710, %s38, 1
      %s712 = scalar_lea.vmem %s1, %s711
      %p713 = pneg %p85
      %p714 = pneg %p82
      %p715 = pneg %p106
      %p716 = pneg %p103
      %p717 = pneg %p127
      %p718 = pneg %p124
      %p719 = pneg %p148
      %p720 = pneg %p145
      %p721 = pneg %p169
      %p722 = pneg %p166
      %p723 = pneg %p190
      %p724 = pneg %p187
      %p725 = pneg %p211
      %p726 = pneg %p208
      %p727 = pneg %p232
      %p728 = pneg %p229
      %p729 = pneg %p253
      %p730 = pneg %p250
      %p731 = pneg %p274
      %p732 = pneg %p271
      %p733 = pneg %p295
      %p734 = pneg %p292
      %p735 = pneg %p316
      %p736 = pneg %p313
      %p737 = pneg %p337
      %p738 = pneg %p334
      %p739 = pneg %p358
      %p740 = pneg %p355
      %p741 = pneg %p379
      %p742 = pneg %p376
      %p743 = pneg %p400
      %p744 = pneg %p397
      %p745 = pneg %p421
      %p746 = pneg %p418
      %p747 = pneg %p442
      %p748 = pneg %p439
      %p749 = pneg %p463
      %p750 = pneg %p460
      %p751 = pneg %p484
      %p752 = pneg %p481
      %p753 = pneg %p505
      %p754 = pneg %p502
      %p755 = pneg %p526
      %p756 = pneg %p523
      %p757 = pneg %p547
      %p758 = pneg %p544
      %p759 = pneg %p568
      %p760 = pneg %p565
      %p761 = pneg %p594
      %p762 = pneg %p591
      %p763 = scmp.lt.s32.totalorder %s38, 1
      %s764 = scalar_select %p763, %s38, 1
      %s765 = scalar_lea.vmem %s25, %s764
      %p766 = scmp.lt.s32.totalorder %s38, 1
      %s767 = scalar_select %p766, %s38, 1
      %s768 = smul.addr %s767, 80
      %s769 = smul.addr %s768, 4
      %s770 = scalar_lea.vmem %s0, %s769
      %p771 = scmp.lt.s32.totalorder %s38, 1
      %s772 = scalar_select %p771, %s38, 1
      %s773 = scalar_lea.vmem %s1, %s772
      %p774 = scmp.lt.s32.totalorder %s38, 1
      %s775 = scalar_select %p774, %s38, 1
      %s776 = scalar_lea.vmem %s25, %s775
      %v778 = vld [vmem:[%s770] sm:$0xff]
      %v779 = vld [vmem:[%s770 + $0x8] sm:$0xff]
      %v780 = vld [vmem:[%s770 + $0x10] sm:$0xff]
      %v781 = vld [vmem:[%s770 + $0x18] sm:$0xff]
      %v782 = vld [vmem:[%s770 + $0x20] sm:$0xff]
      %v783 = vld [vmem:[%s770 + $0x28] sm:$0xff]
      %v784 = vld [vmem:[%s770 + $0x30] sm:$0xff]
      %v785 = vld [vmem:[%s770 + $0x38] sm:$0xff]
      %v786 = vld [vmem:[%s770 + $0x40] sm:$0xff]
      %v787 = vld [vmem:[%s770 + $0x48] sm:$0xff]
      %v788 = vld [vmem:[%s770 + $0x50] sm:$0xff]
      %v789 = vld [vmem:[%s770 + $0x58] sm:$0xff]
      %v790 = vld [vmem:[%s770 + $0x60] sm:$0xff]
      %v791 = vld [vmem:[%s770 + $0x68] sm:$0xff]
      %v792 = vld [vmem:[%s770 + $0x70] sm:$0xff]
      %v793 = vld [vmem:[%s770 + $0x78] sm:$0xff]
      %v794 = vld [vmem:[%s770 + $0x80] sm:$0xff]
      %v795 = vld [vmem:[%s770 + $0x88] sm:$0xff]
      %v796 = vld [vmem:[%s770 + $0x90] sm:$0xff]
      %v797 = vld [vmem:[%s770 + $0x98] sm:$0xff]
      %v798 = vld [vmem:[%s770 + $0xa0] sm:$0xff]
      %v799 = vld [vmem:[%s770 + $0xa8] sm:$0xff]
      %v800 = vld [vmem:[%s770 + $0xb0] sm:$0xff]
      %v801 = vld [vmem:[%s770 + $0xb8] sm:$0xff]
      %v802 = vld [vmem:[%s770 + $0xc0] sm:$0xff]
      %v803 = vld [vmem:[%s770 + $0xc8] sm:$0xff]
      %v804 = vld [vmem:[%s770 + $0xd0] sm:$0xff]
      %v805 = vld [vmem:[%s770 + $0xd8] sm:$0xff]
      %v806 = vld [vmem:[%s770 + $0xe0] sm:$0xff]
      %v807 = vld [vmem:[%s770 + $0xe8] sm:$0xff]
      %v808 = vld [vmem:[%s770 + $0xf0] sm:$0xff]
      %v809 = vld [vmem:[%s770 + $0xf8] sm:$0xff]
      %v810 = vld [vmem:[%s770 + $0x100] sm:$0xff]
      %v811 = vld [vmem:[%s770 + $0x108] sm:$0xff]
      %v812 = vld [vmem:[%s770 + $0x110] sm:$0xff]
      %v813 = vld [vmem:[%s770 + $0x118] sm:$0xff]
      %v814 = vld [vmem:[%s770 + $0x120] sm:$0xff]
      %v815 = vld [vmem:[%s770 + $0x128] sm:$0xff]
      %v816 = vld [vmem:[%s770 + $0x130] sm:$0xff]
      %v817 = vld [vmem:[%s770 + $0x138] sm:$0xff]
      %v818 = vld [vmem:[%s2] sm:$0xf]
      %v819 = vld [vmem:[%s2 + $0x4] sm:$0xf]
      %v820 = vld [vmem:[%s2 + $0x8] sm:$0xf]
      %v821 = vld [vmem:[%s2 + $0xc] sm:$0xf]
      %v822 = vld [vmem:[%s2 + $0x10] sm:$0xf]
      %v823 = vld [vmem:[%s2 + $0x14] sm:$0xf]
      %v824 = vld [vmem:[%s2 + $0x18] sm:$0xf]
      %v825 = vld [vmem:[%s2 + $0x1c] sm:$0xf]
      %v826 = vld [vmem:[%s2 + $0x20] sm:$0xf]
      %v827 = vld [vmem:[%s2 + $0x24] sm:$0xf]
      %v828 = vld [vmem:[%s2 + $0x28] sm:$0xf]
      %v829 = vld [vmem:[%s2 + $0x2c] sm:$0xf]
      %v830 = vld [vmem:[%s2 + $0x30] sm:$0xf]
      %v831 = vld [vmem:[%s2 + $0x34] sm:$0xf]
      %v832 = vld [vmem:[%s2 + $0x38] sm:$0xf]
      %v833 = vld [vmem:[%s2 + $0x3c] sm:$0xf]
      %v834 = vld [vmem:[%s2 + $0x40] sm:$0xf]
      %v835 = vld [vmem:[%s2 + $0x44] sm:$0xf]
      %v836 = vld [vmem:[%s2 + $0x48] sm:$0xf]
      %v837 = vld [vmem:[%s2 + $0x4c] sm:$0xf]
      %v838 = vld [vmem:[%s2 + $0x50] sm:$0xf]
      %v839 = vld [vmem:[%s2 + $0x54] sm:$0xf]
      %v840 = vld [vmem:[%s2 + $0x58] sm:$0xf]
      %v841 = vld [vmem:[%s2 + $0x5c] sm:$0xf]
      %v842 = vld [vmem:[%s2 + $0x60] sm:$0xf]
      %v843 = vld [vmem:[%s2 + $0x64] sm:$0xf]
      %v844 = vld [vmem:[%s2 + $0x68] sm:$0xf]
      %v845 = vld [vmem:[%s2 + $0x6c] sm:$0xf]
      %v846 = vld [vmem:[%s2 + $0x70] sm:$0xf]
      %v847 = vld [vmem:[%s2 + $0x74] sm:$0xf]
      %v848 = vld [vmem:[%s2 + $0x78] sm:$0xf]
      %v849 = vld [vmem:[%s2 + $0x7c] sm:$0xf]
      %v850 = vld [vmem:[%s2 + $0x80] sm:$0xf]
      %v851 = vld [vmem:[%s2 + $0x84] sm:$0xf]
      %v852 = vld [vmem:[%s2 + $0x88] sm:$0xf]
      %v853 = vld [vmem:[%s2 + $0x8c] sm:$0xf]
      %v854 = vld [vmem:[%s2 + $0x90] sm:$0xf]
      %v855 = vld [vmem:[%s2 + $0x94] sm:$0xf]
      %v856 = vld [vmem:[%s2 + $0x98] sm:$0xf]
      %v857 = vld [vmem:[%s2 + $0x9c] sm:$0xf]
      %v858 = vld [vmem:[%s2 + $0xa0] sm:$0xf]
      %v859 = vld [vmem:[%s2 + $0xa4] sm:$0xf]
      %v860 = vld [vmem:[%s2 + $0xa8] sm:$0xf]
      %v861 = vld [vmem:[%s2 + $0xac] sm:$0xf]
      %v862 = vld [vmem:[%s2 + $0xb0] sm:$0xf]
      %v863 = vld [vmem:[%s2 + $0xb4] sm:$0xf]
      %v864 = vld [vmem:[%s2 + $0xb8] sm:$0xf]
      %v865 = vld [vmem:[%s2 + $0xbc] sm:$0xf]
      %v866 = vld [vmem:[%s2 + $0xc0] sm:$0xf]
      %v867 = vld [vmem:[%s2 + $0xc4] sm:$0xf]
      %v868 = vld [vmem:[%s2 + $0xc8] sm:$0xf]
      %v869 = vld [vmem:[%s2 + $0xcc] sm:$0xf]
      %v870 = vld [vmem:[%s2 + $0xd0] sm:$0xf]
      %v871 = vld [vmem:[%s2 + $0xd4] sm:$0xf]
      %v872 = vld [vmem:[%s2 + $0xd8] sm:$0xf]
      %v873 = vld [vmem:[%s2 + $0xdc] sm:$0xf]
      %v874 = vld [vmem:[%s2 + $0xe0] sm:$0xf]
      %v875 = vld [vmem:[%s2 + $0xe4] sm:$0xf]
      %v876 = vld [vmem:[%s2 + $0xe8] sm:$0xf]
      %v877 = vld [vmem:[%s2 + $0xec] sm:$0xf]
      %v878 = vld [vmem:[%s2 + $0xf0] sm:$0xf]
      %v879 = vld [vmem:[%s2 + $0xf4] sm:$0xf]
      %v880 = vld [vmem:[%s2 + $0xf8] sm:$0xf]
      %v881 = vld [vmem:[%s2 + $0xfc] sm:$0xf]
      %v882 = vld [vmem:[%s2 + $0x100] sm:$0xf]
      %v883 = vld [vmem:[%s2 + $0x104] sm:$0xf]
      %v884 = vld [vmem:[%s2 + $0x108] sm:$0xf]
      %v885 = vld [vmem:[%s2 + $0x10c] sm:$0xf]
      %v886 = vld [vmem:[%s2 + $0x110] sm:$0xf]
      %v887 = vld [vmem:[%s2 + $0x114] sm:$0xf]
      %v888 = vld [vmem:[%s2 + $0x118] sm:$0xf]
      %v889 = vld [vmem:[%s2 + $0x11c] sm:$0xf]
      %v890 = vld [vmem:[%s2 + $0x120] sm:$0xf]
      %v891 = vld [vmem:[%s2 + $0x124] sm:$0xf]
      %v892 = vld [vmem:[%s2 + $0x128] sm:$0xf]
      %v893 = vld [vmem:[%s2 + $0x12c] sm:$0xf]
      %v894 = vld [vmem:[%s2 + $0x130] sm:$0xf]
      %v895 = vld [vmem:[%s2 + $0x134] sm:$0xf]
      %v896 = vld [vmem:[%s2 + $0x138] sm:$0xf]
      %v897 = vld [vmem:[%s2 + $0x13c] sm:$0xf]
      %v898 = vld [vmem:[%s2 + $0x140] sm:$0xf]
      %v899 = vld [vmem:[%s2 + $0x144] sm:$0xf]
      %v900 = vld [vmem:[%s2 + $0x148] sm:$0xf]
      %v901 = vld [vmem:[%s2 + $0x14c] sm:$0xf]
      %v902 = vld [vmem:[%s2 + $0x150] sm:$0xf]
      %v903 = vld [vmem:[%s2 + $0x154] sm:$0xf]
      %v904 = vld [vmem:[%s2 + $0x158] sm:$0xf]
      %v905 = vld [vmem:[%s2 + $0x15c] sm:$0xf]
      %v906 = vld [vmem:[%s2 + $0x160] sm:$0xf]
      %v907 = vld [vmem:[%s2 + $0x164] sm:$0xf]
      %v908 = vld [vmem:[%s2 + $0x168] sm:$0xf]
      %v909 = vld [vmem:[%s2 + $0x16c] sm:$0xf]
      %v910 = vld [vmem:[%s2 + $0x170] sm:$0xf]
      %v911 = vld [vmem:[%s2 + $0x174] sm:$0xf]
      %v912 = vld [vmem:[%s2 + $0x178] sm:$0xf]
      %v913 = vld [vmem:[%s2 + $0x17c] sm:$0xf]
      %v914 = vld [vmem:[%s2 + $0x180] sm:$0xf]
      %v915 = vld [vmem:[%s2 + $0x184] sm:$0xf]
      %v916 = vld [vmem:[%s2 + $0x188] sm:$0xf]
      %v917 = vld [vmem:[%s2 + $0x18c] sm:$0xf]
      %v918 = vld [vmem:[%s2 + $0x190] sm:$0xf]
      %v919 = vld [vmem:[%s2 + $0x194] sm:$0xf]
      %v920 = vld [vmem:[%s2 + $0x198] sm:$0xf]
      %v921 = vld [vmem:[%s2 + $0x19c] sm:$0xf]
      %v922 = vld [vmem:[%s2 + $0x1a0] sm:$0xf]
      %v923 = vld [vmem:[%s2 + $0x1a4] sm:$0xf]
      %v924 = vld [vmem:[%s2 + $0x1a8] sm:$0xf]
      %v925 = vld [vmem:[%s2 + $0x1ac] sm:$0xf]
      %v926 = vld [vmem:[%s2 + $0x1b0] sm:$0xf]
      %v927 = vld [vmem:[%s2 + $0x1b4] sm:$0xf]
      %v928 = vld [vmem:[%s2 + $0x1b8] sm:$0xf]
      %v929 = vld [vmem:[%s2 + $0x1bc] sm:$0xf]
      %v930 = vld [vmem:[%s2 + $0x1c0] sm:$0xf]
      %v931 = vld [vmem:[%s2 + $0x1c4] sm:$0xf]
      %v932 = vld [vmem:[%s2 + $0x1c8] sm:$0xf]
      %v933 = vld [vmem:[%s2 + $0x1cc] sm:$0xf]
      %v934 = vld [vmem:[%s2 + $0x1d0] sm:$0xf]
      %v935 = vld [vmem:[%s2 + $0x1d4] sm:$0xf]
      %v936 = vld [vmem:[%s2 + $0x1d8] sm:$0xf]
      %v937 = vld [vmem:[%s2 + $0x1dc] sm:$0xf]
      %v938 = vld [vmem:[%s2 + $0x1e0] sm:$0xf]
      %v939 = vld [vmem:[%s2 + $0x1e4] sm:$0xf]
      %v940 = vld [vmem:[%s2 + $0x1e8] sm:$0xf]
      %v941 = vld [vmem:[%s2 + $0x1ec] sm:$0xf]
      %v942 = vld [vmem:[%s2 + $0x1f0] sm:$0xf]
      %v943 = vld [vmem:[%s2 + $0x1f4] sm:$0xf]
      %v944 = vld [vmem:[%s2 + $0x1f8] sm:$0xf]
      %v945 = vld [vmem:[%s2 + $0x1fc] sm:$0xf]
      %v946 = vld [vmem:[%s2 + $0x200] sm:$0xf]
      %v947 = vld [vmem:[%s2 + $0x204] sm:$0xf]
      %v948 = vld [vmem:[%s2 + $0x208] sm:$0xf]
      %v949 = vld [vmem:[%s2 + $0x20c] sm:$0xf]
      %v950 = vld [vmem:[%s2 + $0x210] sm:$0xf]
      %v951 = vld [vmem:[%s2 + $0x214] sm:$0xf]
      %v952 = vld [vmem:[%s2 + $0x218] sm:$0xf]
      %v953 = vld [vmem:[%s2 + $0x21c] sm:$0xf]
      %v954 = vld [vmem:[%s2 + $0x220] sm:$0xf]
      %v955 = vld [vmem:[%s2 + $0x224] sm:$0xf]
      %v956 = vld [vmem:[%s2 + $0x228] sm:$0xf]
      %v957 = vld [vmem:[%s2 + $0x22c] sm:$0xf]
      %v958 = vld [vmem:[%s2 + $0x230] sm:$0xf]
      %v959 = vld [vmem:[%s2 + $0x234] sm:$0xf]
      %v960 = vld [vmem:[%s2 + $0x238] sm:$0xf]
      %v961 = vld [vmem:[%s2 + $0x23c] sm:$0xf]
      %v962 = vld [vmem:[%s2 + $0x240] sm:$0xf]
      %v963 = vld [vmem:[%s2 + $0x244] sm:$0xf]
      %v964 = vld [vmem:[%s2 + $0x248] sm:$0xf]
      %v965 = vld [vmem:[%s2 + $0x24c] sm:$0xf]
      %v966 = vld [vmem:[%s2 + $0x250] sm:$0xf]
      %v967 = vld [vmem:[%s2 + $0x254] sm:$0xf]
      %v968 = vld [vmem:[%s2 + $0x258] sm:$0xf]
      %v969 = vld [vmem:[%s2 + $0x25c] sm:$0xf]
      %v970 = vld [vmem:[%s2 + $0x260] sm:$0xf]
      %v971 = vld [vmem:[%s2 + $0x264] sm:$0xf]
      %v972 = vld [vmem:[%s2 + $0x268] sm:$0xf]
      %v973 = vld [vmem:[%s2 + $0x26c] sm:$0xf]
      %v974 = vld [vmem:[%s2 + $0x270] sm:$0xf]
      %v975 = vld [vmem:[%s2 + $0x274] sm:$0xf]
      %v976 = vld [vmem:[%s2 + $0x278] sm:$0xf]
      %v977 = vld [vmem:[%s2 + $0x27c] sm:$0xf]
      %v978 = vld [vmem:[%s3] sm:$0x1]
      %v980 = vlaneseq
      %v981 = vshrl.u32 %v980, 7
      %v982 = vsub.s32 0, %v981
      %v983 = vrot.slane %v978, %v982
      %v1025 = vunpack.c.l.b16 %v778
      %v1026 = vunpack.c.h.b16 %v778
      %v1027 = vunpack.c.l.b16 %v779
      %v1028 = vunpack.c.h.b16 %v779
      %v1029 = vunpack.c.l.b16 %v780
      %v1030 = vunpack.c.h.b16 %v780
      %v1031 = vunpack.c.l.b16 %v781
      %v1032 = vunpack.c.h.b16 %v781
      %v1033 = vunpack.c.l.b16 %v782
      %v1034 = vunpack.c.h.b16 %v782
      %v1035 = vunpack.c.l.b16 %v783
      %v1036 = vunpack.c.h.b16 %v783
      %v1037 = vunpack.c.l.b16 %v784
      %v1038 = vunpack.c.h.b16 %v784
      %v1039 = vunpack.c.l.b16 %v785
      %v1040 = vunpack.c.h.b16 %v785
      %v1041 = vunpack.c.l.b16 %v786
      %v1042 = vunpack.c.h.b16 %v786
      %v1043 = vunpack.c.l.b16 %v787
      %v1044 = vunpack.c.h.b16 %v787
      %v1045 = vunpack.c.l.b16 %v788
      %v1046 = vunpack.c.h.b16 %v788
      %v1047 = vunpack.c.l.b16 %v789
      %v1048 = vunpack.c.h.b16 %v789
      %v1049 = vunpack.c.l.b16 %v790
      %v1050 = vunpack.c.h.b16 %v790
      %v1051 = vunpack.c.l.b16 %v791
      %v1052 = vunpack.c.h.b16 %v791
      %v1053 = vunpack.c.l.b16 %v792
      %v1054 = vunpack.c.h.b16 %v792
      %v1055 = vunpack.c.l.b16 %v793
      %v1056 = vunpack.c.h.b16 %v793
      %v1057 = vunpack.c.l.b16 %v794
      %v1058 = vunpack.c.h.b16 %v794
      %v1059 = vunpack.c.l.b16 %v795
      %v1060 = vunpack.c.h.b16 %v795
      %v1061 = vunpack.c.l.b16 %v796
      %v1062 = vunpack.c.h.b16 %v796
      %v1063 = vunpack.c.l.b16 %v797
      %v1064 = vunpack.c.h.b16 %v797
      %v1065 = vunpack.c.l.b16 %v798
      %v1066 = vunpack.c.h.b16 %v798
      %v1067 = vunpack.c.l.b16 %v799
      %v1068 = vunpack.c.h.b16 %v799
      %v1069 = vunpack.c.l.b16 %v800
      %v1070 = vunpack.c.h.b16 %v800
      %v1071 = vunpack.c.l.b16 %v801
      %v1072 = vunpack.c.h.b16 %v801
      %v1073 = vunpack.c.l.b16 %v802
      %v1074 = vunpack.c.h.b16 %v802
      %v1075 = vunpack.c.l.b16 %v803
      %v1076 = vunpack.c.h.b16 %v803
      %v1077 = vunpack.c.l.b16 %v804
      %v1078 = vunpack.c.h.b16 %v804
      %v1079 = vunpack.c.l.b16 %v805
      %v1080 = vunpack.c.h.b16 %v805
      %v1081 = vunpack.c.l.b16 %v806
      %v1082 = vunpack.c.h.b16 %v806
      %v1083 = vunpack.c.l.b16 %v807
      %v1084 = vunpack.c.h.b16 %v807
      %v1085 = vunpack.c.l.b16 %v808
      %v1086 = vunpack.c.h.b16 %v808
      %v1087 = vunpack.c.l.b16 %v809
      %v1088 = vunpack.c.h.b16 %v809
      %v1089 = vunpack.c.l.b16 %v810
      %v1090 = vunpack.c.h.b16 %v810
      %v1091 = vunpack.c.l.b16 %v811
      %v1092 = vunpack.c.h.b16 %v811
      %v1093 = vunpack.c.l.b16 %v812
      %v1094 = vunpack.c.h.b16 %v812
      %v1095 = vunpack.c.l.b16 %v813
      %v1096 = vunpack.c.h.b16 %v813
      %v1097 = vunpack.c.l.b16 %v814
      %v1098 = vunpack.c.h.b16 %v814
      %v1099 = vunpack.c.l.b16 %v815
      %v1100 = vunpack.c.h.b16 %v815
      %v1101 = vunpack.c.l.b16 %v816
      %v1102 = vunpack.c.h.b16 %v816
      %v1103 = vunpack.c.l.b16 %v817
      %v1104 = vunpack.c.h.b16 %v817
      %v1105 = vpack.c.b16 %v1035, %v1025
      %v1106 = vpack.c.b16 %v1036, %v1026
      %v1107 = vpack.c.b16 %v1037, %v1027
      %v1108 = vpack.c.b16 %v1038, %v1028
      %v1109 = vpack.c.b16 %v1039, %v1029
      %v1110 = vpack.c.b16 %v1040, %v1030
      %v1111 = vpack.c.b16 %v1041, %v1031
      %v1112 = vpack.c.b16 %v1042, %v1032
      %v1113 = vpack.c.b16 %v1043, %v1033
      %v1114 = vpack.c.b16 %v1044, %v1034
      %v1115 = vpack.c.b16 %v1055, %v1045
      %v1116 = vpack.c.b16 %v1056, %v1046
      %v1117 = vpack.c.b16 %v1057, %v1047
      %v1118 = vpack.c.b16 %v1058, %v1048
      %v1119 = vpack.c.b16 %v1059, %v1049
      %v1120 = vpack.c.b16 %v1060, %v1050
      %v1121 = vpack.c.b16 %v1061, %v1051
      %v1122 = vpack.c.b16 %v1062, %v1052
      %v1123 = vpack.c.b16 %v1063, %v1053
      %v1124 = vpack.c.b16 %v1064, %v1054
      %v1125 = vpack.c.b16 %v1075, %v1065
      %v1126 = vpack.c.b16 %v1076, %v1066
      %v1127 = vpack.c.b16 %v1077, %v1067
      %v1128 = vpack.c.b16 %v1078, %v1068
      %v1129 = vpack.c.b16 %v1079, %v1069
      %v1130 = vpack.c.b16 %v1080, %v1070
      %v1131 = vpack.c.b16 %v1081, %v1071
      %v1132 = vpack.c.b16 %v1082, %v1072
      %v1133 = vpack.c.b16 %v1083, %v1073
      %v1134 = vpack.c.b16 %v1084, %v1074
      %v1135 = vpack.c.b16 %v1095, %v1085
      %v1136 = vpack.c.b16 %v1096, %v1086
      %v1137 = vpack.c.b16 %v1097, %v1087
      %v1138 = vpack.c.b16 %v1098, %v1088
      %v1139 = vpack.c.b16 %v1099, %v1089
      %v1140 = vpack.c.b16 %v1100, %v1090
      %v1141 = vpack.c.b16 %v1101, %v1091
      %v1142 = vpack.c.b16 %v1102, %v1092
      %v1143 = vpack.c.b16 %v1103, %v1093
      %v1144 = vpack.c.b16 %v1104, %v1094
      %v1345 = vunpack.c.l.b16 %v818
      %v1346 = vunpack.c.l.b16 %v819
      %v1347 = vunpack.c.l.b16 %v820
      %v1348 = vunpack.c.l.b16 %v821
      %v1349 = vunpack.c.l.b16 %v822
      %v1350 = vunpack.c.l.b16 %v823
      %v1351 = vunpack.c.l.b16 %v824
      %v1352 = vunpack.c.l.b16 %v825
      %v1353 = vunpack.c.l.b16 %v826
      %v1354 = vunpack.c.l.b16 %v827
      %v1355 = vunpack.c.l.b16 %v828
      %v1356 = vunpack.c.l.b16 %v829
      %v1357 = vunpack.c.l.b16 %v830
      %v1358 = vunpack.c.l.b16 %v831
      %v1359 = vunpack.c.l.b16 %v832
      %v1360 = vunpack.c.l.b16 %v833
      %v1361 = vunpack.c.l.b16 %v834
      %v1362 = vunpack.c.l.b16 %v835
      %v1363 = vunpack.c.l.b16 %v836
      %v1364 = vunpack.c.l.b16 %v837
      %v1365 = vunpack.c.l.b16 %v838
      %v1366 = vunpack.c.l.b16 %v839
      %v1367 = vunpack.c.l.b16 %v840
      %v1368 = vunpack.c.l.b16 %v841
      %v1369 = vunpack.c.l.b16 %v842
      %v1370 = vunpack.c.l.b16 %v843
      %v1371 = vunpack.c.l.b16 %v844
      %v1372 = vunpack.c.l.b16 %v845
      %v1373 = vunpack.c.l.b16 %v846
      %v1374 = vunpack.c.l.b16 %v847
      %v1375 = vunpack.c.l.b16 %v848
      %v1376 = vunpack.c.l.b16 %v849
      %v1377 = vunpack.c.l.b16 %v850
      %v1378 = vunpack.c.l.b16 %v851
      %v1379 = vunpack.c.l.b16 %v852
      %v1380 = vunpack.c.l.b16 %v853
      %v1381 = vunpack.c.l.b16 %v854
      %v1382 = vunpack.c.l.b16 %v855
      %v1383 = vunpack.c.l.b16 %v856
      %v1384 = vunpack.c.l.b16 %v857
      %v1385 = vunpack.c.l.b16 %v858
      %v1386 = vunpack.c.l.b16 %v859
      %v1387 = vunpack.c.l.b16 %v860
      %v1388 = vunpack.c.l.b16 %v861
      %v1389 = vunpack.c.l.b16 %v862
      %v1390 = vunpack.c.l.b16 %v863
      %v1391 = vunpack.c.l.b16 %v864
      %v1392 = vunpack.c.l.b16 %v865
      %v1393 = vunpack.c.l.b16 %v866
      %v1394 = vunpack.c.l.b16 %v867
      %v1395 = vunpack.c.l.b16 %v868
      %v1396 = vunpack.c.l.b16 %v869
      %v1397 = vunpack.c.l.b16 %v870
      %v1398 = vunpack.c.l.b16 %v871
      %v1399 = vunpack.c.l.b16 %v872
      %v1400 = vunpack.c.l.b16 %v873
      %v1401 = vunpack.c.l.b16 %v874
      %v1402 = vunpack.c.l.b16 %v875
      %v1403 = vunpack.c.l.b16 %v876
      %v1404 = vunpack.c.l.b16 %v877
      %v1405 = vunpack.c.l.b16 %v878
      %v1406 = vunpack.c.l.b16 %v879
      %v1407 = vunpack.c.l.b16 %v880
      %v1408 = vunpack.c.l.b16 %v881
      %v1409 = vunpack.c.l.b16 %v882
      %v1410 = vunpack.c.l.b16 %v883
      %v1411 = vunpack.c.l.b16 %v884
      %v1412 = vunpack.c.l.b16 %v885
      %v1413 = vunpack.c.l.b16 %v886
      %v1414 = vunpack.c.l.b16 %v887
      %v1415 = vunpack.c.l.b16 %v888
      %v1416 = vunpack.c.l.b16 %v889
      %v1417 = vunpack.c.l.b16 %v890
      %v1418 = vunpack.c.l.b16 %v891
      %v1419 = vunpack.c.l.b16 %v892
      %v1420 = vunpack.c.l.b16 %v893
      %v1421 = vunpack.c.l.b16 %v894
      %v1422 = vunpack.c.l.b16 %v895
      %v1423 = vunpack.c.l.b16 %v896
      %v1424 = vunpack.c.l.b16 %v897
      %v1425 = vunpack.c.l.b16 %v898
      %v1426 = vunpack.c.l.b16 %v899
      %v1427 = vunpack.c.l.b16 %v900
      %v1428 = vunpack.c.l.b16 %v901
      %v1429 = vunpack.c.l.b16 %v902
      %v1430 = vunpack.c.l.b16 %v903
      %v1431 = vunpack.c.l.b16 %v904
      %v1432 = vunpack.c.l.b16 %v905
      %v1433 = vunpack.c.l.b16 %v906
      %v1434 = vunpack.c.l.b16 %v907
      %v1435 = vunpack.c.l.b16 %v908
      %v1436 = vunpack.c.l.b16 %v909
      %v1437 = vunpack.c.l.b16 %v910
      %v1438 = vunpack.c.l.b16 %v911
      %v1439 = vunpack.c.l.b16 %v912
      %v1440 = vunpack.c.l.b16 %v913
      %v1441 = vunpack.c.l.b16 %v914
      %v1442 = vunpack.c.l.b16 %v915
      %v1443 = vunpack.c.l.b16 %v916
      %v1444 = vunpack.c.l.b16 %v917
      %v1445 = vunpack.c.l.b16 %v918
      %v1446 = vunpack.c.l.b16 %v919
      %v1447 = vunpack.c.l.b16 %v920
      %v1448 = vunpack.c.l.b16 %v921
      %v1449 = vunpack.c.l.b16 %v922
      %v1450 = vunpack.c.l.b16 %v923
      %v1451 = vunpack.c.l.b16 %v924
      %v1452 = vunpack.c.l.b16 %v925
      %v1453 = vunpack.c.l.b16 %v926
      %v1454 = vunpack.c.l.b16 %v927
      %v1455 = vunpack.c.l.b16 %v928
      %v1456 = vunpack.c.l.b16 %v929
      %v1457 = vunpack.c.l.b16 %v930
      %v1458 = vunpack.c.l.b16 %v931
      %v1459 = vunpack.c.l.b16 %v932
      %v1460 = vunpack.c.l.b16 %v933
      %v1461 = vunpack.c.l.b16 %v934
      %v1462 = vunpack.c.l.b16 %v935
      %v1463 = vunpack.c.l.b16 %v936
      %v1464 = vunpack.c.l.b16 %v937
      %v1465 = vunpack.c.l.b16 %v938
      %v1466 = vunpack.c.l.b16 %v939
      %v1467 = vunpack.c.l.b16 %v940
      %v1468 = vunpack.c.l.b16 %v941
      %v1469 = vunpack.c.l.b16 %v942
      %v1470 = vunpack.c.l.b16 %v943
      %v1471 = vunpack.c.l.b16 %v944
      %v1472 = vunpack.c.l.b16 %v945
      %v1473 = vunpack.c.l.b16 %v946
      %v1474 = vunpack.c.l.b16 %v947
      %v1475 = vunpack.c.l.b16 %v948
      %v1476 = vunpack.c.l.b16 %v949
      %v1477 = vunpack.c.l.b16 %v950
      %v1478 = vunpack.c.l.b16 %v951
      %v1479 = vunpack.c.l.b16 %v952
      %v1480 = vunpack.c.l.b16 %v953
      %v1481 = vunpack.c.l.b16 %v954
      %v1482 = vunpack.c.l.b16 %v955
      %v1483 = vunpack.c.l.b16 %v956
      %v1484 = vunpack.c.l.b16 %v957
      %v1485 = vunpack.c.l.b16 %v958
      %v1486 = vunpack.c.l.b16 %v959
      %v1487 = vunpack.c.l.b16 %v960
      %v1488 = vunpack.c.l.b16 %v961
      %v1489 = vunpack.c.l.b16 %v962
      %v1490 = vunpack.c.l.b16 %v963
      %v1491 = vunpack.c.l.b16 %v964
      %v1492 = vunpack.c.l.b16 %v965
      %v1493 = vunpack.c.l.b16 %v966
      %v1494 = vunpack.c.l.b16 %v967
      %v1495 = vunpack.c.l.b16 %v968
      %v1496 = vunpack.c.l.b16 %v969
      %v1497 = vunpack.c.l.b16 %v970
      %v1498 = vunpack.c.l.b16 %v971
      %v1499 = vunpack.c.l.b16 %v972
      %v1500 = vunpack.c.l.b16 %v973
      %v1501 = vunpack.c.l.b16 %v974
      %v1502 = vunpack.c.l.b16 %v975
      %v1503 = vunpack.c.l.b16 %v976
      %v1504 = vunpack.c.l.b16 %v977
      %v1505 = vpack.c.b16 %v1346, %v1345
      %v1506 = vpack.c.b16 %v1348, %v1347
      %v1507 = vpack.c.b16 %v1350, %v1349
      %v1508 = vpack.c.b16 %v1352, %v1351
      %v1509 = vpack.c.b16 %v1354, %v1353
      %v1510 = vpack.c.b16 %v1356, %v1355
      %v1511 = vpack.c.b16 %v1358, %v1357
      %v1512 = vpack.c.b16 %v1360, %v1359
      %v1513 = vpack.c.b16 %v1362, %v1361
      %v1514 = vpack.c.b16 %v1364, %v1363
      %v1515 = vpack.c.b16 %v1366, %v1365
      %v1516 = vpack.c.b16 %v1368, %v1367
      %v1517 = vpack.c.b16 %v1370, %v1369
      %v1518 = vpack.c.b16 %v1372, %v1371
      %v1519 = vpack.c.b16 %v1374, %v1373
      %v1520 = vpack.c.b16 %v1376, %v1375
      %v1521 = vpack.c.b16 %v1378, %v1377
      %v1522 = vpack.c.b16 %v1380, %v1379
      %v1523 = vpack.c.b16 %v1382, %v1381
      %v1524 = vpack.c.b16 %v1384, %v1383
      %v1525 = vpack.c.b16 %v1386, %v1385
      %v1526 = vpack.c.b16 %v1388, %v1387
      %v1527 = vpack.c.b16 %v1390, %v1389
      %v1528 = vpack.c.b16 %v1392, %v1391
      %v1529 = vpack.c.b16 %v1394, %v1393
      %v1530 = vpack.c.b16 %v1396, %v1395
      %v1531 = vpack.c.b16 %v1398, %v1397
      %v1532 = vpack.c.b16 %v1400, %v1399
      %v1533 = vpack.c.b16 %v1402, %v1401
      %v1534 = vpack.c.b16 %v1404, %v1403
      %v1535 = vpack.c.b16 %v1406, %v1405
      %v1536 = vpack.c.b16 %v1408, %v1407
      %v1537 = vpack.c.b16 %v1410, %v1409
      %v1538 = vpack.c.b16 %v1412, %v1411
      %v1539 = vpack.c.b16 %v1414, %v1413
      %v1540 = vpack.c.b16 %v1416, %v1415
      %v1541 = vpack.c.b16 %v1418, %v1417
      %v1542 = vpack.c.b16 %v1420, %v1419
      %v1543 = vpack.c.b16 %v1422, %v1421
      %v1544 = vpack.c.b16 %v1424, %v1423
      %v1545 = vpack.c.b16 %v1426, %v1425
      %v1546 = vpack.c.b16 %v1428, %v1427
      %v1547 = vpack.c.b16 %v1430, %v1429
      %v1548 = vpack.c.b16 %v1432, %v1431
      %v1549 = vpack.c.b16 %v1434, %v1433
      %v1550 = vpack.c.b16 %v1436, %v1435
      %v1551 = vpack.c.b16 %v1438, %v1437
      %v1552 = vpack.c.b16 %v1440, %v1439
      %v1553 = vpack.c.b16 %v1442, %v1441
      %v1554 = vpack.c.b16 %v1444, %v1443
      %v1555 = vpack.c.b16 %v1446, %v1445
      %v1556 = vpack.c.b16 %v1448, %v1447
      %v1557 = vpack.c.b16 %v1450, %v1449
      %v1558 = vpack.c.b16 %v1452, %v1451
      %v1559 = vpack.c.b16 %v1454, %v1453
      %v1560 = vpack.c.b16 %v1456, %v1455
      %v1561 = vpack.c.b16 %v1458, %v1457
      %v1562 = vpack.c.b16 %v1460, %v1459
      %v1563 = vpack.c.b16 %v1462, %v1461
      %v1564 = vpack.c.b16 %v1464, %v1463
      %v1565 = vpack.c.b16 %v1466, %v1465
      %v1566 = vpack.c.b16 %v1468, %v1467
      %v1567 = vpack.c.b16 %v1470, %v1469
      %v1568 = vpack.c.b16 %v1472, %v1471
      %v1569 = vpack.c.b16 %v1474, %v1473
      %v1570 = vpack.c.b16 %v1476, %v1475
      %v1571 = vpack.c.b16 %v1478, %v1477
      %v1572 = vpack.c.b16 %v1480, %v1479
      %v1573 = vpack.c.b16 %v1482, %v1481
      %v1574 = vpack.c.b16 %v1484, %v1483
      %v1575 = vpack.c.b16 %v1486, %v1485
      %v1576 = vpack.c.b16 %v1488, %v1487
      %v1577 = vpack.c.b16 %v1490, %v1489
      %v1578 = vpack.c.b16 %v1492, %v1491
      %v1579 = vpack.c.b16 %v1494, %v1493
      %v1580 = vpack.c.b16 %v1496, %v1495
      %v1581 = vpack.c.b16 %v1498, %v1497
      %v1582 = vpack.c.b16 %v1500, %v1499
      %v1583 = vpack.c.b16 %v1502, %v1501
      %v1584 = vpack.c.b16 %v1504, %v1503
      %1665 = vmatprep.subr.bf16.mxu0 0
      %1666 = vmatpush1.bf16.msra.mxu0 %v1505
      %1667 = vmatprep.subr.bf16.mxu0 0
      %1668 = vmatpush1.bf16.msra.mxu0 %v1506
      %1669 = vmatprep.subr.bf16.mxu0 0
      %1670 = vmatpush1.bf16.msra.mxu0 %v1507
      %1671 = vmatprep.subr.bf16.mxu0 0
      %1672 = vmatpush1.bf16.msra.mxu0 %v1508
      %1673 = vmatprep.subr.bf16.mxu0 0
      %1674 = vmatpush1.bf16.msra.mxu0 %v1509
      %1675 = vmatprep.subr.bf16.mxu0 0
      %1676 = vmatpush1.bf16.msra.mxu0 %v1510
      %1677 = vmatprep.subr.bf16.mxu0 0
      %1678 = vmatpush1.bf16.msra.mxu0 %v1511
      %1679 = vmatprep.subr.bf16.mxu0 0
      %1680 = vmatpush1.bf16.msra.mxu0 %v1512
      %1681 = vmatprep.subr.bf16.mxu0 0
      %1682 = vmatpush1.bf16.msra.mxu0 %v1513
      %1683 = vmatprep.subr.bf16.mxu0 0
      %1684 = vmatpush1.bf16.msra.mxu0 %v1514
      %1685 = vmatprep.subr.bf16.mxu0 0
      %1686 = vmatpush1.bf16.msra.mxu0 %v1515
      %1687 = vmatprep.subr.bf16.mxu0 0
      %1688 = vmatpush1.bf16.msra.mxu0 %v1516
      %1689 = vmatprep.subr.bf16.mxu0 0
      %1690 = vmatpush1.bf16.msra.mxu0 %v1517
      %1691 = vmatprep.subr.bf16.mxu0 0
      %1692 = vmatpush1.bf16.msra.mxu0 %v1518
      %1693 = vmatprep.subr.bf16.mxu0 0
      %1694 = vmatpush1.bf16.msra.mxu0 %v1519
      %1695 = vmatprep.subr.bf16.mxu0 0
      %1696 = vmatpush1.bf16.msra.mxu0 %v1520
      %1697 = vmatprep.mubr.bf16.mxu0 %v1106
      %1698 = vmatmul.mubr.bf16.gmra.mrb[0].mxu0 %v1105
      %v1699 = vpop.f32.mrb[0].mxu0
      %v1700 = vadd.f32 %v983, %v1699
      %v1701 = vpop.f32.mrb[0].mxu0
      %v1702 = vpop.f32.mrb[0].mxu0
      %v1703 = vadd.f32 %v983, %v1702
      %v1704 = vpop.f32.mrb[0].mxu0
      %1705 = vmatprep.mubr.bf16.mxu0 %v1116
      %1706 = vmatmul.mubr.bf16.gmra.mrb[0].mxu0 %v1115
      %v1707 = vpop.f32.mrb[0].mxu0
      %v1708 = vadd.f32 %v983, %v1707
      %v1709 = vpop.f32.mrb[0].mxu0
      %v1710 = vpop.f32.mrb[0].mxu0
      %v1711 = vadd.f32 %v983, %v1710
      %v1712 = vpop.f32.mrb[0].mxu0
      %1713 = vmatprep.mubr.bf16.mxu0 %v1126
      %1714 = vmatmul.mubr.bf16.gmra.mrb[0].mxu0 %v1125
      %v1715 = vpop.f32.mrb[0].mxu0
      %v1716 = vadd.f32 %v983, %v1715
      %v1717 = vpop.f32.mrb[0].mxu0
      %v1718 = vpop.f32.mrb[0].mxu0
      %v1719 = vadd.f32 %v983, %v1718
      %v1720 = vpop.f32.mrb[0].mxu0
      %1721 = vmatprep.mubr.bf16.mxu0 %v1136
      %1722 = vmatmul.mubr.bf16.gmra.mrb[0].mxu0 %v1135
      %v1723 = vpop.f32.mrb[0].mxu0
      %v1724 = vadd.f32 %v983, %v1723
      %v1725 = vpop.f32.mrb[0].mxu0
      %v1726 = vpop.f32.mrb[0].mxu0
      %v1727 = vadd.f32 %v983, %v1726
      %v1728 = vpop.f32.mrb[0].mxu0
      %1729 = vdwg.mxu0
      %1730 = vmatprep.subr.bf16.mxu0 0
      %1731 = vmatpush1.bf16.msra.mxu0 %v1521
      %1732 = vmatprep.subr.bf16.mxu0 0
      %1733 = vmatpush1.bf16.msra.mxu0 %v1522
      %1734 = vmatprep.subr.bf16.mxu0 0
      %1735 = vmatpush1.bf16.msra.mxu0 %v1523
      %1736 = vmatprep.subr.bf16.mxu0 0
      %1737 = vmatpush1.bf16.msra.mxu0 %v1524
      %1738 = vmatprep.subr.bf16.mxu0 0
      %1739 = vmatpush1.bf16.msra.mxu0 %v1525
      %1740 = vmatprep.subr.bf16.mxu0 0
      %1741 = vmatpush1.bf16.msra.mxu0 %v1526
      %1742 = vmatprep.subr.bf16.mxu0 0
      %1743 = vmatpush1.bf16.msra.mxu0 %v1527
      %1744 = vmatprep.subr.bf16.mxu0 0
      %1745 = vmatpush1.bf16.msra.mxu0 %v1528
      %1746 = vmatprep.subr.bf16.mxu0 0
      %1747 = vmatpush1.bf16.msra.mxu0 %v1529
      %1748 = vmatprep.subr.bf16.mxu0 0
      %1749 = vmatpush1.bf16.msra.mxu0 %v1530
      %1750 = vmatprep.subr.bf16.mxu0 0
      %1751 = vmatpush1.bf16.msra.mxu0 %v1531
      %1752 = vmatprep.subr.bf16.mxu0 0
      %1753 = vmatpush1.bf16.msra.mxu0 %v1532
      %1754 = vmatprep.subr.bf16.mxu0 0
      %1755 = vmatpush1.bf16.msra.mxu0 %v1533
      %1756 = vmatprep.subr.bf16.mxu0 0
      %1757 = vmatpush1.bf16.msra.mxu0 %v1534
      %1758 = vmatprep.subr.bf16.mxu0 0
      %1759 = vmatpush1.bf16.msra.mxu0 %v1535
      %1760 = vmatprep.subr.bf16.mxu0 0
      %1761 = vmatpush1.bf16.msra.mxu0 %v1536
      %1762 = vmatprep.mubr.bf16.mxu0 %v1108
      %1763 = vmatmul.mubr.bf16.gmra.mrb[0].mxu0 %v1107
      %v1764 = vpop.f32.mrb[0].mxu0
      %v1765 = vadd.f32 %v1700, %v1764
      %v1766 = vpop.f32.mrb[0].mxu0
      %v1767 = vpop.f32.mrb[0].mxu0
      %v1768 = vadd.f32 %v1703, %v1767
      %v1769 = vpop.f32.mrb[0].mxu0
      %1770 = vmatprep.mubr.bf16.mxu0 %v1118
      %1771 = vmatmul.mubr.bf16.gmra.mrb[0].mxu0 %v1117
      %v1772 = vpop.f32.mrb[0].mxu0
      %v1773 = vadd.f32 %v1708, %v1772
      %v1774 = vpop.f32.mrb[0].mxu0
      %v1775 = vpop.f32.mrb[0].mxu0
      %v1776 = vadd.f32 %v1711, %v1775
      %v1777 = vpop.f32.mrb[0].mxu0
      %1778 = vmatprep.mubr.bf16.mxu0 %v1128
      %1779 = vmatmul.mubr.bf16.gmra.mrb[0].mxu0 %v1127
      %v1780 = vpop.f32.mrb[0].mxu0
      %v1781 = vadd.f32 %v1716, %v1780
      %v1782 = vpop.f32.mrb[0].mxu0
      %v1783 = vpop.f32.mrb[0].mxu0
      %v1784 = vadd.f32 %v1719, %v1783
      %v1785 = vpop.f32.mrb[0].mxu0
      %1786 = vmatprep.mubr.bf16.mxu0 %v1138
      %1787 = vmatmul.mubr.bf16.gmra.mrb[0].mxu0 %v1137
      %v1788 = vpop.f32.mrb[0].mxu0
      %v1789 = vadd.f32 %v1724, %v1788
      %v1790 = vpop.f32.mrb[0].mxu0
      %v1791 = vpop.f32.mrb[0].mxu0
      %v1792 = vadd.f32 %v1727, %v1791
      %v1793 = vpop.f32.mrb[0].mxu0
      %1794 = vdwg.mxu0
      %1795 = vmatprep.subr.bf16.mxu0 0
      %1796 = vmatpush1.bf16.msra.mxu0 %v1537
      %1797 = vmatprep.subr.bf16.mxu0 0
      %1798 = vmatpush1.bf16.msra.mxu0 %v1538
      %1799 = vmatprep.subr.bf16.mxu0 0
      %1800 = vmatpush1.bf16.msra.mxu0 %v1539
      %1801 = vmatprep.subr.bf16.mxu0 0
      %1802 = vmatpush1.bf16.msra.mxu0 %v1540
      %1803 = vmatprep.subr.bf16.mxu0 0
      %1804 = vmatpush1.bf16.msra.mxu0 %v1541
      %1805 = vmatprep.subr.bf16.mxu0 0
      %1806 = vmatpush1.bf16.msra.mxu0 %v1542
      %1807 = vmatprep.subr.bf16.mxu0 0
      %1808 = vmatpush1.bf16.msra.mxu0 %v1543
      %1809 = vmatprep.subr.bf16.mxu0 0
      %1810 = vmatpush1.bf16.msra.mxu0 %v1544
      %1811 = vmatprep.subr.bf16.mxu0 0
      %1812 = vmatpush1.bf16.msra.mxu0 %v1545
      %1813 = vmatprep.subr.bf16.mxu0 0
      %1814 = vmatpush1.bf16.msra.mxu0 %v1546
      %1815 = vmatprep.subr.bf16.mxu0 0
      %1816 = vmatpush1.bf16.msra.mxu0 %v1547
      %1817 = vmatprep.subr.bf16.mxu0 0
      %1818 = vmatpush1.bf16.msra.mxu0 %v1548
      %1819 = vmatprep.subr.bf16.mxu0 0
      %1820 = vmatpush1.bf16.msra.mxu0 %v1549
      %1821 = vmatprep.subr.bf16.mxu0 0
      %1822 = vmatpush1.bf16.msra.mxu0 %v1550
      %1823 = vmatprep.subr.bf16.mxu0 0
      %1824 = vmatpush1.bf16.msra.mxu0 %v1551
      %1825 = vmatprep.subr.bf16.mxu0 0
      %1826 = vmatpush1.bf16.msra.mxu0 %v1552
      %1827 = vmatprep.mubr.bf16.mxu0 %v1110
      %1828 = vmatmul.mubr.bf16.gmra.mrb[0].mxu0 %v1109
      %v1829 = vpop.f32.mrb[0].mxu0
      %v1830 = vadd.f32 %v1765, %v1829
      %v1831 = vpop.f32.mrb[0].mxu0
      %v1832 = vpop.f32.mrb[0].mxu0
      %v1833 = vadd.f32 %v1768, %v1832
      %v1834 = vpop.f32.mrb[0].mxu0
      %1835 = vmatprep.mubr.bf16.mxu0 %v1120
      %1836 = vmatmul.mubr.bf16.gmra.mrb[0].mxu0 %v1119
      %v1837 = vpop.f32.mrb[0].mxu0
      %v1838 = vadd.f32 %v1773, %v1837
      %v1839 = vpop.f32.mrb[0].mxu0
      %v1840 = vpop.f32.mrb[0].mxu0
      %v1841 = vadd.f32 %v1776, %v1840
      %v1842 = vpop.f32.mrb[0].mxu0
      %1843 = vmatprep.mubr.bf16.mxu0 %v1130
      %1844 = vmatmul.mubr.bf16.gmra.mrb[0].mxu0 %v1129
      %v1845 = vpop.f32.mrb[0].mxu0
      %v1846 = vadd.f32 %v1781, %v1845
      %v1847 = vpop.f32.mrb[0].mxu0
      %v1848 = vpop.f32.mrb[0].mxu0
      %v1849 = vadd.f32 %v1784, %v1848
      %v1850 = vpop.f32.mrb[0].mxu0
      %1851 = vmatprep.mubr.bf16.mxu0 %v1140
      %1852 = vmatmul.mubr.bf16.gmra.mrb[0].mxu0 %v1139
      %v1853 = vpop.f32.mrb[0].mxu0
      %v1854 = vadd.f32 %v1789, %v1853
      %v1855 = vpop.f32.mrb[0].mxu0
      %v1856 = vpop.f32.mrb[0].mxu0
      %v1857 = vadd.f32 %v1792, %v1856
      %v1858 = vpop.f32.mrb[0].mxu0
      %1859 = vdwg.mxu0
      %1860 = vmatprep.subr.bf16.mxu0 0
      %1861 = vmatpush1.bf16.msra.mxu0 %v1553
      %1862 = vmatprep.subr.bf16.mxu0 0
      %1863 = vmatpush1.bf16.msra.mxu0 %v1554
      %1864 = vmatprep.subr.bf16.mxu0 0
      %1865 = vmatpush1.bf16.msra.mxu0 %v1555
      %1866 = vmatprep.subr.bf16.mxu0 0
      %1867 = vmatpush1.bf16.msra.mxu0 %v1556
      %1868 = vmatprep.subr.bf16.mxu0 0
      %1869 = vmatpush1.bf16.msra.mxu0 %v1557
      %1870 = vmatprep.subr.bf16.mxu0 0
      %1871 = vmatpush1.bf16.msra.mxu0 %v1558
      %1872 = vmatprep.subr.bf16.mxu0 0
      %1873 = vmatpush1.bf16.msra.mxu0 %v1559
      %1874 = vmatprep.subr.bf16.mxu0 0
      %1875 = vmatpush1.bf16.msra.mxu0 %v1560
      %1876 = vmatprep.subr.bf16.mxu0 0
      %1877 = vmatpush1.bf16.msra.mxu0 %v1561
      %1878 = vmatprep.subr.bf16.mxu0 0
      %1879 = vmatpush1.bf16.msra.mxu0 %v1562
      %1880 = vmatprep.subr.bf16.mxu0 0
      %1881 = vmatpush1.bf16.msra.mxu0 %v1563
      %1882 = vmatprep.subr.bf16.mxu0 0
      %1883 = vmatpush1.bf16.msra.mxu0 %v1564
      %1884 = vmatprep.subr.bf16.mxu0 0
      %1885 = vmatpush1.bf16.msra.mxu0 %v1565
      %1886 = vmatprep.subr.bf16.mxu0 0
      %1887 = vmatpush1.bf16.msra.mxu0 %v1566
      %1888 = vmatprep.subr.bf16.mxu0 0
      %1889 = vmatpush1.bf16.msra.mxu0 %v1567
      %1890 = vmatprep.subr.bf16.mxu0 0
      %1891 = vmatpush1.bf16.msra.mxu0 %v1568
      %1892 = vmatprep.mubr.bf16.mxu0 %v1112
      %1893 = vmatmul.mubr.bf16.gmra.mrb[0].mxu0 %v1111
      %v1894 = vpop.f32.mrb[0].mxu0
      %v1895 = vadd.f32 %v1830, %v1894
      %v1896 = vpop.f32.mrb[0].mxu0
      %v1897 = vpop.f32.mrb[0].mxu0
      %v1898 = vadd.f32 %v1833, %v1897
      %v1899 = vpop.f32.mrb[0].mxu0
      %1900 = vmatprep.mubr.bf16.mxu0 %v1122
      %1901 = vmatmul.mubr.bf16.gmra.mrb[0].mxu0 %v1121
      %v1902 = vpop.f32.mrb[0].mxu0
      %v1903 = vadd.f32 %v1838, %v1902
      %v1904 = vpop.f32.mrb[0].mxu0
      %v1905 = vpop.f32.mrb[0].mxu0
      %v1906 = vadd.f32 %v1841, %v1905
      %v1907 = vpop.f32.mrb[0].mxu0
      %1908 = vmatprep.mubr.bf16.mxu0 %v1132
      %1909 = vmatmul.mubr.bf16.gmra.mrb[0].mxu0 %v1131
      %v1910 = vpop.f32.mrb[0].mxu0
      %v1911 = vadd.f32 %v1846, %v1910
      %v1912 = vpop.f32.mrb[0].mxu0
      %v1913 = vpop.f32.mrb[0].mxu0
      %v1914 = vadd.f32 %v1849, %v1913
      %v1915 = vpop.f32.mrb[0].mxu0
      %1916 = vmatprep.mubr.bf16.mxu0 %v1142
      %1917 = vmatmul.mubr.bf16.gmra.mrb[0].mxu0 %v1141
      %v1918 = vpop.f32.mrb[0].mxu0
      %v1919 = vadd.f32 %v1854, %v1918
      %v1920 = vpop.f32.mrb[0].mxu0
      %v1921 = vpop.f32.mrb[0].mxu0
      %v1922 = vadd.f32 %v1857, %v1921
      %v1923 = vpop.f32.mrb[0].mxu0
      %1924 = vdwg.mxu0
      %1925 = vmatprep.subr.bf16.mxu0 0
      %1926 = vmatpush1.bf16.msra.mxu0 %v1569
      %1927 = vmatprep.subr.bf16.mxu0 0
      %1928 = vmatpush1.bf16.msra.mxu0 %v1570
      %1929 = vmatprep.subr.bf16.mxu0 0
      %1930 = vmatpush1.bf16.msra.mxu0 %v1571
      %1931 = vmatprep.subr.bf16.mxu0 0
      %1932 = vmatpush1.bf16.msra.mxu0 %v1572
      %1933 = vmatprep.subr.bf16.mxu0 0
      %1934 = vmatpush1.bf16.msra.mxu0 %v1573
      %1935 = vmatprep.subr.bf16.mxu0 0
      %1936 = vmatpush1.bf16.msra.mxu0 %v1574
      %1937 = vmatprep.subr.bf16.mxu0 0
      %1938 = vmatpush1.bf16.msra.mxu0 %v1575
      %1939 = vmatprep.subr.bf16.mxu0 0
      %1940 = vmatpush1.bf16.msra.mxu0 %v1576
      %1941 = vmatprep.subr.bf16.mxu0 0
      %1942 = vmatpush1.bf16.msra.mxu0 %v1577
      %1943 = vmatprep.subr.bf16.mxu0 0
      %1944 = vmatpush1.bf16.msra.mxu0 %v1578
      %1945 = vmatprep.subr.bf16.mxu0 0
      %1946 = vmatpush1.bf16.msra.mxu0 %v1579
      %1947 = vmatprep.subr.bf16.mxu0 0
      %1948 = vmatpush1.bf16.msra.mxu0 %v1580
      %1949 = vmatprep.subr.bf16.mxu0 0
      %1950 = vmatpush1.bf16.msra.mxu0 %v1581
      %1951 = vmatprep.subr.bf16.mxu0 0
      %1952 = vmatpush1.bf16.msra.mxu0 %v1582
      %1953 = vmatprep.subr.bf16.mxu0 0
      %1954 = vmatpush1.bf16.msra.mxu0 %v1583
      %1955 = vmatprep.subr.bf16.mxu0 0
      %1956 = vmatpush1.bf16.msra.mxu0 %v1584
      %1957 = vmatprep.mubr.bf16.mxu0 %v1114
      %1958 = vmatmul.mubr.bf16.gmra.mrb[0].mxu0 %v1113
      %v1959 = vpop.f32.mrb[0].mxu0
      %v1960 = vadd.f32 %v1895, %v1959
      %v1961 = vpop.f32.mrb[0].mxu0
      %v1962 = vpop.f32.mrb[0].mxu0
      %v1963 = vadd.f32 %v1898, %v1962
      %v1964 = vpop.f32.mrb[0].mxu0
      %1965 = vmatprep.mubr.bf16.mxu0 %v1124
      %1966 = vmatmul.mubr.bf16.gmra.mrb[0].mxu0 %v1123
      %v1967 = vpop.f32.mrb[0].mxu0
      %v1968 = vadd.f32 %v1903, %v1967
      %v1969 = vpop.f32.mrb[0].mxu0
      %v1970 = vpop.f32.mrb[0].mxu0
      %v1971 = vadd.f32 %v1906, %v1970
      %v1972 = vpop.f32.mrb[0].mxu0
      %1973 = vmatprep.mubr.bf16.mxu0 %v1134
      %1974 = vmatmul.mubr.bf16.gmra.mrb[0].mxu0 %v1133
      %v1975 = vpop.f32.mrb[0].mxu0
      %v1976 = vadd.f32 %v1911, %v1975
      %v1977 = vpop.f32.mrb[0].mxu0
      %v1978 = vpop.f32.mrb[0].mxu0
      %v1979 = vadd.f32 %v1914, %v1978
      %v1980 = vpop.f32.mrb[0].mxu0
      %1981 = vmatprep.mubr.bf16.mxu0 %v1144
      %1982 = vmatmul.mubr.bf16.gmra.mrb[0].mxu0 %v1143
      %v1983 = vpop.f32.mrb[0].mxu0
      %v1984 = vadd.f32 %v1919, %v1983
      %v1985 = vpop.f32.mrb[0].mxu0
      %v1986 = vpop.f32.mrb[0].mxu0
      %v1987 = vadd.f32 %v1922, %v1986
      %v1988 = vpop.f32.mrb[0].mxu0
      %1989 = vdwg.mxu0
      %v1990 = vmax.f32 %v1960, 0.0
      %v1991 = vmax.f32 %v1963, 0.0
      %v1992 = vmax.f32 %v1968, 0.0
      %v1993 = vmax.f32 %v1971, 0.0
      %v1994 = vmax.f32 %v1976, 0.0
      %v1995 = vmax.f32 %v1979, 0.0
      %v1996 = vmax.f32 %v1984, 0.0
      %v1997 = vmax.f32 %v1987, 0.0
      %v1998 = vadd.f32 %v1990, %v1991
      %v1999 = vadd.f32 %v1998, %v1992
      %v2000 = vadd.f32 %v1999, %v1993
      %v2001 = vadd.f32 %v2000, %v1994
      %v2002 = vadd.f32 %v2001, %v1995
      %v2003 = vadd.f32 %v2002, %v1996
      %v2004 = vadd.f32 %v2003, %v1997
      %v2005 = vrot.slane %v2004, 4
      %v2006 = vadd.f32 %v2004, %v2005
      %v2007 = vrot.slane %v2006, 2
      %v2008 = vadd.f32 %v2006, %v2007
      %v2009 = vrot.slane %v2008, 1
      %v2010 = vadd.f32 %v2008, %v2009
      %v2011 = vrcp.pop 64.0
      %v2012 = vmul.f32 %v2010, %v2011
      %v2013 = vpack.c.bf16 %v2012, %v2012
      %v2014 = vld [vmem:[%s4] sm:$0xff]
      %v2015 = vld [vmem:[%s4 + $0x8] sm:$0xff]
      %v2016 = vld [vmem:[%s4 + $0x10] sm:$0xff]
      %v2017 = vld [vmem:[%s4 + $0x18] sm:$0xff]
      %v2018 = vld [vmem:[%s4 + $0x20] sm:$0xff]
      %v2019 = vld [vmem:[%s4 + $0x28] sm:$0xff]
      %v2020 = vld [vmem:[%s4 + $0x30] sm:$0xff]
      %v2021 = vld [vmem:[%s4 + $0x38] sm:$0xff]
      %v2022 = vld [vmem:[%s4 + $0x40] sm:$0xff]
      %v2023 = vld [vmem:[%s4 + $0x48] sm:$0xff]
      %v2024 = vld [vmem:[%s4 + $0x50] sm:$0xff]
      %v2025 = vld [vmem:[%s4 + $0x58] sm:$0xff]
      %v2026 = vld [vmem:[%s4 + $0x60] sm:$0xff]
      %v2027 = vld [vmem:[%s4 + $0x68] sm:$0xff]
      %v2028 = vld [vmem:[%s4 + $0x70] sm:$0xff]
      %v2029 = vld [vmem:[%s4 + $0x78] sm:$0xff]
      %v2030 = vld [vmem:[%s5] sm:$0x3]
      %v2047 = vunpack.c.l.b16 %v2014
      %v2048 = vunpack.c.h.b16 %v2014
      %v2049 = vunpack.c.l.b16 %v2015
      %v2050 = vunpack.c.h.b16 %v2015
      %v2051 = vunpack.c.l.b16 %v2016
      %v2052 = vunpack.c.h.b16 %v2016
      %v2053 = vunpack.c.l.b16 %v2017
      %v2054 = vunpack.c.h.b16 %v2017
      %v2055 = vunpack.c.l.b16 %v2018
      %v2056 = vunpack.c.h.b16 %v2018
      %v2057 = vunpack.c.l.b16 %v2019
      %v2058 = vunpack.c.h.b16 %v2019
      %v2059 = vunpack.c.l.b16 %v2020
      %v2060 = vunpack.c.h.b16 %v2020
      %v2061 = vunpack.c.l.b16 %v2021
      %v2062 = vunpack.c.h.b16 %v2021
      %v2063 = vunpack.c.l.b16 %v2022
      %v2064 = vunpack.c.h.b16 %v2022
      %v2065 = vunpack.c.l.b16 %v2023
      %v2066 = vunpack.c.h.b16 %v2023
      %v2067 = vunpack.c.l.b16 %v2024
      %v2068 = vunpack.c.h.b16 %v2024
      %v2069 = vunpack.c.l.b16 %v2025
      %v2070 = vunpack.c.h.b16 %v2025
      %v2071 = vunpack.c.l.b16 %v2026
      %v2072 = vunpack.c.h.b16 %v2026
      %v2073 = vunpack.c.l.b16 %v2027
      %v2074 = vunpack.c.h.b16 %v2027
      %v2075 = vunpack.c.l.b16 %v2028
      %v2076 = vunpack.c.h.b16 %v2028
      %v2077 = vunpack.c.l.b16 %v2029
      %v2078 = vunpack.c.h.b16 %v2029
      %v2079 = vpack.c.b16 %v2049, %v2047
      %v2080 = vpack.c.b16 %v2050, %v2048
      %v2081 = vpack.c.b16 %v2053, %v2051
      %v2082 = vpack.c.b16 %v2054, %v2052
      %v2083 = vpack.c.b16 %v2057, %v2055
      %v2084 = vpack.c.b16 %v2058, %v2056
      %v2085 = vpack.c.b16 %v2061, %v2059
      %v2086 = vpack.c.b16 %v2062, %v2060
      %v2087 = vpack.c.b16 %v2065, %v2063
      %v2088 = vpack.c.b16 %v2066, %v2064
      %v2089 = vpack.c.b16 %v2069, %v2067
      %v2090 = vpack.c.b16 %v2070, %v2068
      %v2091 = vpack.c.b16 %v2073, %v2071
      %v2092 = vpack.c.b16 %v2074, %v2072
      %v2093 = vpack.c.b16 %v2077, %v2075
      %v2094 = vpack.c.b16 %v2078, %v2076
      %v2112 = vlaneseq
      %v2113 = vshrl.u32 %v2112, 7
      %v2114 = vsub.s32 0, %v2113
      %v2115 = vrot.slane %v2030, %v2114
      %v2116 = vlaneseq
      %v2117 = vshrl.u32 %v2116, 7
      %v2118 = vsub.s32 1, %v2117
      %v2119 = vrot.slane %v2030, %v2118
      %2122 = vmatprep.subr.bf16.mxu0 %v2080
      %2123 = vmatpush1.bf16.msra.mxu0 %v2079
      %2124 = vmatprep.subr.bf16.mxu0 %v2082
      %2125 = vmatpush1.bf16.msra.mxu0 %v2081
      %2126 = vmatprep.subr.bf16.mxu0 %v2084
      %2127 = vmatpush1.bf16.msra.mxu0 %v2083
      %2128 = vmatprep.subr.bf16.mxu0 %v2086
      %2129 = vmatpush1.bf16.msra.mxu0 %v2085
      %2130 = vmatprep.subr.bf16.mxu0 %v2088
      %2131 = vmatpush1.bf16.msra.mxu0 %v2087
      %2132 = vmatprep.subr.bf16.mxu0 %v2090
      %2133 = vmatpush1.bf16.msra.mxu0 %v2089
      %2134 = vmatprep.subr.bf16.mxu0 %v2092
      %2135 = vmatpush1.bf16.msra.mxu0 %v2091
      %2136 = vmatprep.subr.bf16.mxu0 %v2094
      %2137 = vmatpush1.bf16.msra.mxu0 %v2093
      %2138 = vmatprep.subr.bf16.mxu0 0
      %2139 = vmatpush1.bf16.msra.mxu0 0
      %2140 = vmatprep.subr.bf16.mxu0 0
      %2141 = vmatpush1.bf16.msra.mxu0 0
      %2142 = vmatprep.subr.bf16.mxu0 0
      %2143 = vmatpush1.bf16.msra.mxu0 0
      %2144 = vmatprep.subr.bf16.mxu0 0
      %2145 = vmatpush1.bf16.msra.mxu0 0
      %2146 = vmatprep.subr.bf16.mxu0 0
      %2147 = vmatpush1.bf16.msra.mxu0 0
      %2148 = vmatprep.subr.bf16.mxu0 0
      %2149 = vmatpush1.bf16.msra.mxu0 0
      %2150 = vmatprep.subr.bf16.mxu0 0
      %2151 = vmatpush1.bf16.msra.mxu0 0
      %2152 = vmatprep.subr.bf16.mxu0 0
      %2153 = vmatpush1.bf16.msra.mxu0 0
      %2154 = vmatprep.mubr.bf16.mxu0 0
      %2155 = vmatmul.mubr.bf16.gmra.mrb[0].mxu0 %v2013
      %v2156 = vpop.f32.mrb[0].mxu0
      %v2157 = vadd.f32 %v2115, %v2156
      %v2158 = vpop.f32.mrb[0].mxu0
      %v2159 = vadd.f32 %v2119, %v2158
      %v2160 = vpop.f32.mrb[0].mxu0
      %v2161 = vpop.f32.mrb[0].mxu0
      %2162 = vdwg.mxu0
      %v2163 = vld [vmem:[%s773] sm:$0x1]
      %v2164 = vld [vmem:[%s6] sm:$0xff]
      %v2165 = vld [vmem:[%s6 + $0x8] sm:$0xff]
      %v2166 = vld [vmem:[%s6 + $0x10] sm:$0xff]
      %v2167 = vld [vmem:[%s6 + $0x18] sm:$0xff]
      %v2168 = vld [vmem:[%s6 + $0x20] sm:$0xff]
      %v2169 = vld [vmem:[%s6 + $0x28] sm:$0xff]
      %v2170 = vld [vmem:[%s6 + $0x30] sm:$0xff]
      %v2171 = vld [vmem:[%s6 + $0x38] sm:$0xff]
      %v2172 = vld [vmem:[%s6 + $0x40] sm:$0xff]
      %v2173 = vld [vmem:[%s6 + $0x48] sm:$0x1f]
      %v2174 = vld [vmem:[%s7] sm:$0x1]
      %vm2175 = vcmask 629760
      %v2177 = vsel %vm2175, %v2163, 0
      %vm2179 = vcmask 1044480
      %v2181 = vsel %vm2179, %v2173, 0
      %2183 = vmatprep.subr.mxu0 0.0
      %2184 = vmatpush1.msra.mxu0 %v2164
      %2185 = vmatprep.subr.mxu0 0.0
      %2186 = vmatpush1.msra.mxu0 %v2165
      %2187 = vmatprep.subr.mxu0 0.0
      %2188 = vmatpush1.msra.mxu0 %v2166
      %2189 = vmatprep.subr.mxu0 0.0
      %2190 = vmatpush1.msra.mxu0 %v2167
      %2191 = vmatprep.subr.mxu0 0.0
      %2192 = vmatpush1.msra.mxu0 %v2168
      %2193 = vmatprep.subr.mxu0 0.0
      %2194 = vmatpush1.msra.mxu0 %v2169
      %2195 = vmatprep.subr.mxu0 0.0
      %2196 = vmatpush1.msra.mxu0 %v2170
      %2197 = vmatprep.subr.mxu0 0.0
      %2198 = vmatpush1.msra.mxu0 %v2171
      %2199 = vmatprep.subr.mxu0 0.0
      %2200 = vmatpush1.msra.mxu0 %v2172
      %2201 = vmatprep.subr.mxu0 0.0
      %2202 = vmatpush1.msra.mxu0 %v2181
      %2203 = vmatprep.subr.mxu0 0.0
      %2204 = vmatpush1.msra.mxu0 0.0
      %2205 = vmatprep.subr.mxu0 0.0
      %2206 = vmatpush1.msra.mxu0 0.0
      %2207 = vmatprep.subr.mxu0 0.0
      %2208 = vmatpush1.msra.mxu0 0.0
      %2209 = vmatprep.subr.mxu0 0.0
      %2210 = vmatpush1.msra.mxu0 0.0
      %2211 = vmatprep.subr.mxu0 0.0
      %2212 = vmatpush1.msra.mxu0 0.0
      %2213 = vmatprep.subr.mxu0 0.0
      %2214 = vmatpush1.msra.mxu0 0.0
      %2215 = vmatprep.subr.mxu0 0.0
      %2216 = vmatpush1.msra.mxu0 0.0
      %2217 = vmatprep.subr.mxu0 0.0
      %2218 = vmatpush1.msra.mxu0 0.0
      %2219 = vmatprep.subr.mxu0 0.0
      %2220 = vmatpush1.msra.mxu0 0.0
      %2221 = vmatprep.subr.mxu0 0.0
      %2222 = vmatpush1.msra.mxu0 0.0
      %2223 = vmatprep.subr.mxu0 0.0
      %2224 = vmatpush1.msra.mxu0 0.0
      %2225 = vmatprep.subr.mxu0 0.0
      %2226 = vmatpush1.msra.mxu0 0.0
      %2227 = vmatprep.subr.mxu0 0.0
      %2228 = vmatpush1.msra.mxu0 0.0
      %2229 = vmatprep.subr.mxu0 0.0
      %2230 = vmatpush1.msra.mxu0 0.0
      %2231 = vmatprep.subr.mxu0 0.0
      %2232 = vmatpush1.msra.mxu0 0.0
      %2233 = vmatprep.subr.mxu0 0.0
      %2234 = vmatpush1.msra.mxu0 0.0
      %2235 = vmatprep.subr.mxu0 0.0
      %2236 = vmatpush1.msra.mxu0 0.0
      %2237 = vmatprep.subr.mxu0 0.0
      %2238 = vmatpush1.msra.mxu0 0.0
      %2239 = vmatprep.subr.mxu0 0.0
      %2240 = vmatpush1.msra.mxu0 0.0
      %2241 = vmatprep.subr.mxu0 0.0
      %2242 = vmatpush1.msra.mxu0 0.0
      %2243 = vmatprep.subr.mxu0 0.0
      %2244 = vmatpush1.msra.mxu0 0.0
      %2245 = vmatprep.subr.mxu0 0.0
      %2246 = vmatpush1.msra.mxu0 0.0
      %2247 = vmatprep.mubr.f32.mxu0 0.0
      %2248 = vmatmul.mubr.f32.gmra.mrb[0].mxu0 %v2177
      %v2249 = vpop.f32.mrb[0].mxu0
      %v2250 = vadd.f32 %v2174, %v2249
      %v2251 = vpop.f32.mrb[0].mxu0
      %2252 = vdwg.mxu0
      %v2253 = vld [vmem:[%s8] sm:$0x1]
      %v2254 = vld [vmem:[%s9] sm:$0x1]
      %vm2255 = vcmask 1040384
      %v2256 = vsel %vm2255, %v2250, 0.0
      %2257 = vadd.xlane.f32.xlu0 %v2256
      %v2258 = vpop.xlane.xlu0 %2257
      %v2259 = vrcp.pop 128.0
      %v2260 = vmul.f32 %v2258, %v2259
      %v2261 = vsub.f32 %v2250, %v2260
      %v2262 = vmul.f32 %v2261, %v2261
      %v2263 = vsel %vm2255, %v2262, 0.0
      %2264 = vadd.xlane.f32.xlu0 %v2263
      %v2265 = vpop.xlane.xlu0 %2264
      %v2266 = vmul.f32 %v2265, %v2259
      %v2267 = vadd.f32 %v2266, 1e-05
      %v2268 = vrsqrt.pop %v2267
      %v2269 = vmul.f32 %v2261, %v2268
      %v2270 = vmul.f32 %v2269, %v2253
      %v2271 = vadd.f32 %v2270, %v2254
      %v2272 = vmax.f32 %v2271, 0.0
      %v2273 = vld [vmem:[%s10] sm:$0xff]
      %v2274 = vld [vmem:[%s10 + $0x8] sm:$0xff]
      %v2275 = vld [vmem:[%s10 + $0x10] sm:$0xff]
      %v2276 = vld [vmem:[%s10 + $0x18] sm:$0xff]
      %v2277 = vld [vmem:[%s10 + $0x20] sm:$0xff]
      %v2278 = vld [vmem:[%s10 + $0x28] sm:$0xff]
      %v2279 = vld [vmem:[%s10 + $0x30] sm:$0xff]
      %v2280 = vld [vmem:[%s10 + $0x38] sm:$0xff]
      %v2281 = vld [vmem:[%s10 + $0x40] sm:$0xff]
      %v2282 = vld [vmem:[%s10 + $0x48] sm:$0xff]
      %v2283 = vld [vmem:[%s10 + $0x50] sm:$0xff]
      %v2284 = vld [vmem:[%s10 + $0x58] sm:$0xff]
      %v2285 = vld [vmem:[%s10 + $0x60] sm:$0xff]
      %v2286 = vld [vmem:[%s10 + $0x68] sm:$0xff]
      %v2287 = vld [vmem:[%s10 + $0x70] sm:$0xff]
      %v2288 = vld [vmem:[%s10 + $0x78] sm:$0xff]
      %v2289 = vld [vmem:[%s11] sm:$0x1]
      %2290 = vmatprep.subr.mxu0 0.0
      %2291 = vmatpush1.msra.mxu0 %v2273
      %2292 = vmatprep.subr.mxu0 0.0
      %2293 = vmatpush1.msra.mxu0 %v2274
      %2294 = vmatprep.subr.mxu0 0.0
      %2295 = vmatpush1.msra.mxu0 %v2275
      %2296 = vmatprep.subr.mxu0 0.0
      %2297 = vmatpush1.msra.mxu0 %v2276
      %2298 = vmatprep.subr.mxu0 0.0
      %2299 = vmatpush1.msra.mxu0 %v2277
      %2300 = vmatprep.subr.mxu0 0.0
      %2301 = vmatpush1.msra.mxu0 %v2278
      %2302 = vmatprep.subr.mxu0 0.0
      %2303 = vmatpush1.msra.mxu0 %v2279
      %2304 = vmatprep.subr.mxu0 0.0
      %2305 = vmatpush1.msra.mxu0 %v2280
      %2306 = vmatprep.subr.mxu0 0.0
      %2307 = vmatpush1.msra.mxu0 %v2281
      %2308 = vmatprep.subr.mxu0 0.0
      %2309 = vmatpush1.msra.mxu0 %v2282
      %2310 = vmatprep.subr.mxu0 0.0
      %2311 = vmatpush1.msra.mxu0 %v2283
      %2312 = vmatprep.subr.mxu0 0.0
      %2313 = vmatpush1.msra.mxu0 %v2284
      %2314 = vmatprep.subr.mxu0 0.0
      %2315 = vmatpush1.msra.mxu0 %v2285
      %2316 = vmatprep.subr.mxu0 0.0
      %2317 = vmatpush1.msra.mxu0 %v2286
      %2318 = vmatprep.subr.mxu0 0.0
      %2319 = vmatpush1.msra.mxu0 %v2287
      %2320 = vmatprep.subr.mxu0 0.0
      %2321 = vmatpush1.msra.mxu0 %v2288
      %2322 = vmatprep.subr.mxu0 0.0
      %2323 = vmatpush1.msra.mxu0 0.0
      %2324 = vmatprep.subr.mxu0 0.0
      %2325 = vmatpush1.msra.mxu0 0.0
      %2326 = vmatprep.subr.mxu0 0.0
      %2327 = vmatpush1.msra.mxu0 0.0
      %2328 = vmatprep.subr.mxu0 0.0
      %2329 = vmatpush1.msra.mxu0 0.0
      %2330 = vmatprep.subr.mxu0 0.0
      %2331 = vmatpush1.msra.mxu0 0.0
      %2332 = vmatprep.subr.mxu0 0.0
      %2333 = vmatpush1.msra.mxu0 0.0
      %2334 = vmatprep.subr.mxu0 0.0
      %2335 = vmatpush1.msra.mxu0 0.0
      %2336 = vmatprep.subr.mxu0 0.0
      %2337 = vmatpush1.msra.mxu0 0.0
      %2338 = vmatprep.subr.mxu0 0.0
      %2339 = vmatpush1.msra.mxu0 0.0
      %2340 = vmatprep.subr.mxu0 0.0
      %2341 = vmatpush1.msra.mxu0 0.0
      %2342 = vmatprep.subr.mxu0 0.0
      %2343 = vmatpush1.msra.mxu0 0.0
      %2344 = vmatprep.subr.mxu0 0.0
      %2345 = vmatpush1.msra.mxu0 0.0
      %2346 = vmatprep.subr.mxu0 0.0
      %2347 = vmatpush1.msra.mxu0 0.0
      %2348 = vmatprep.subr.mxu0 0.0
      %2349 = vmatpush1.msra.mxu0 0.0
      %2350 = vmatprep.subr.mxu0 0.0
      %2351 = vmatpush1.msra.mxu0 0.0
      %2352 = vmatprep.subr.mxu0 0.0
      %2353 = vmatpush1.msra.mxu0 0.0
      %2354 = vmatprep.mubr.f32.mxu0 0.0
      %2355 = vmatmul.mubr.f32.gmra.mrb[0].mxu0 %v2272
      %v2356 = vpop.f32.mrb[0].mxu0
      %v2357 = vadd.f32 %v2289, %v2356
      %v2358 = vpop.f32.mrb[0].mxu0
      %2359 = vdwg.mxu0
      %v2360 = vld [vmem:[%s12] sm:$0x1]
      %v2361 = vld [vmem:[%s13] sm:$0x1]
      %vm2362 = vcmask 622592
      %v2363 = vsel %vm2362, %v2357, 0.0
      %2364 = vadd.xlane.f32.xlu0 %v2363
      %v2365 = vpop.xlane.xlu0 %2364
      %v2366 = vrcp.pop 77.0
      %v2367 = vmul.f32 %v2365, %v2366
      %v2368 = vsub.f32 %v2357, %v2367
      %v2369 = vmul.f32 %v2368, %v2368
      %v2370 = vsel %vm2362, %v2369, 0.0
      %2371 = vadd.xlane.f32.xlu0 %v2370
      %v2372 = vpop.xlane.xlu0 %2371
      %v2373 = vmul.f32 %v2372, %v2366
      %v2374 = vadd.f32 %v2373, 1e-05
      %v2375 = vrsqrt.pop %v2374
      %v2376 = vmul.f32 %v2368, %v2375
      %v2377 = vmul.f32 %v2376, %v2360
      %v2378 = vadd.f32 %v2377, %v2361
      %v2379 = vmax.f32 %v2378, 0.0
      %v2380 = vadd.f32 %v2379, %v2163
      %v2381 = vld [vmem:[%s14] sm:$0xff]
      %v2382 = vld [vmem:[%s14 + $0x8] sm:$0xff]
      %v2383 = vld [vmem:[%s14 + $0x10] sm:$0xff]
      %v2384 = vld [vmem:[%s14 + $0x18] sm:$0xff]
      %v2385 = vld [vmem:[%s14 + $0x20] sm:$0xff]
      %v2386 = vld [vmem:[%s14 + $0x28] sm:$0xff]
      %v2387 = vld [vmem:[%s14 + $0x30] sm:$0xff]
      %v2388 = vld [vmem:[%s14 + $0x38] sm:$0xff]
      %v2389 = vld [vmem:[%s14 + $0x40] sm:$0xff]
      %v2390 = vld [vmem:[%s14 + $0x48] sm:$0x1f]
      %v2391 = vld [vmem:[%s15] sm:$0x1]
      %v2393 = vsel %vm2175, %v2380, 0
      %v2396 = vsel %vm2179, %v2390, 0
      %2398 = vmatprep.subr.mxu0 0.0
      %2399 = vmatpush1.msra.mxu0 %v2381
      %2400 = vmatprep.subr.mxu0 0.0
      %2401 = vmatpush1.msra.mxu0 %v2382
      %2402 = vmatprep.subr.mxu0 0.0
      %2403 = vmatpush1.msra.mxu0 %v2383
      %2404 = vmatprep.subr.mxu0 0.0
      %2405 = vmatpush1.msra.mxu0 %v2384
      %2406 = vmatprep.subr.mxu0 0.0
      %2407 = vmatpush1.msra.mxu0 %v2385
      %2408 = vmatprep.subr.mxu0 0.0
      %2409 = vmatpush1.msra.mxu0 %v2386
      %2410 = vmatprep.subr.mxu0 0.0
      %2411 = vmatpush1.msra.mxu0 %v2387
      %2412 = vmatprep.subr.mxu0 0.0
      %2413 = vmatpush1.msra.mxu0 %v2388
      %2414 = vmatprep.subr.mxu0 0.0
      %2415 = vmatpush1.msra.mxu0 %v2389
      %2416 = vmatprep.subr.mxu0 0.0
      %2417 = vmatpush1.msra.mxu0 %v2396
      %2418 = vmatprep.subr.mxu0 0.0
      %2419 = vmatpush1.msra.mxu0 0.0
      %2420 = vmatprep.subr.mxu0 0.0
      %2421 = vmatpush1.msra.mxu0 0.0
      %2422 = vmatprep.subr.mxu0 0.0
      %2423 = vmatpush1.msra.mxu0 0.0
      %2424 = vmatprep.subr.mxu0 0.0
      %2425 = vmatpush1.msra.mxu0 0.0
      %2426 = vmatprep.subr.mxu0 0.0
      %2427 = vmatpush1.msra.mxu0 0.0
      %2428 = vmatprep.subr.mxu0 0.0
      %2429 = vmatpush1.msra.mxu0 0.0
      %2430 = vmatprep.subr.mxu0 0.0
      %2431 = vmatpush1.msra.mxu0 0.0
      %2432 = vmatprep.subr.mxu0 0.0
      %2433 = vmatpush1.msra.mxu0 0.0
      %2434 = vmatprep.subr.mxu0 0.0
      %2435 = vmatpush1.msra.mxu0 0.0
      %2436 = vmatprep.subr.mxu0 0.0
      %2437 = vmatpush1.msra.mxu0 0.0
      %2438 = vmatprep.subr.mxu0 0.0
      %2439 = vmatpush1.msra.mxu0 0.0
      %2440 = vmatprep.subr.mxu0 0.0
      %2441 = vmatpush1.msra.mxu0 0.0
      %2442 = vmatprep.subr.mxu0 0.0
      %2443 = vmatpush1.msra.mxu0 0.0
      %2444 = vmatprep.subr.mxu0 0.0
      %2445 = vmatpush1.msra.mxu0 0.0
      %2446 = vmatprep.subr.mxu0 0.0
      %2447 = vmatpush1.msra.mxu0 0.0
      %2448 = vmatprep.subr.mxu0 0.0
      %2449 = vmatpush1.msra.mxu0 0.0
      %2450 = vmatprep.subr.mxu0 0.0
      %2451 = vmatpush1.msra.mxu0 0.0
      %2452 = vmatprep.subr.mxu0 0.0
      %2453 = vmatpush1.msra.mxu0 0.0
      %2454 = vmatprep.subr.mxu0 0.0
      %2455 = vmatpush1.msra.mxu0 0.0
      %2456 = vmatprep.subr.mxu0 0.0
      %2457 = vmatpush1.msra.mxu0 0.0
      %2458 = vmatprep.subr.mxu0 0.0
      %2459 = vmatpush1.msra.mxu0 0.0
      %2460 = vmatprep.subr.mxu0 0.0
      %2461 = vmatpush1.msra.mxu0 0.0
      %2462 = vmatprep.mubr.f32.mxu0 0.0
      %2463 = vmatmul.mubr.f32.gmra.mrb[0].mxu0 %v2393
      %v2464 = vpop.f32.mrb[0].mxu0
      %v2465 = vadd.f32 %v2391, %v2464
      %v2466 = vpop.f32.mrb[0].mxu0
      %2467 = vdwg.mxu0
      %v2468 = vld [vmem:[%s16] sm:$0x1]
      %v2469 = vld [vmem:[%s17] sm:$0x1]
      %v2470 = vsel %vm2255, %v2465, 0.0
      %2471 = vadd.xlane.f32.xlu0 %v2470
      %v2472 = vpop.xlane.xlu0 %2471
      %v2473 = vmul.f32 %v2472, %v2259
      %v2474 = vsub.f32 %v2465, %v2473
      %v2475 = vmul.f32 %v2474, %v2474
      %v2476 = vsel %vm2255, %v2475, 0.0
      %2477 = vadd.xlane.f32.xlu0 %v2476
      %v2478 = vpop.xlane.xlu0 %2477
      %v2479 = vmul.f32 %v2478, %v2259
      %v2480 = vadd.f32 %v2479, 1e-05
      %v2481 = vrsqrt.pop %v2480
      %v2482 = vmul.f32 %v2474, %v2481
      %v2483 = vmul.f32 %v2482, %v2468
      %v2484 = vadd.f32 %v2483, %v2469
      %v2485 = vmax.f32 %v2484, 0.0
      %v2486 = vld [vmem:[%s18] sm:$0xff]
      %v2487 = vld [vmem:[%s18 + $0x8] sm:$0xff]
      %v2488 = vld [vmem:[%s18 + $0x10] sm:$0xff]
      %v2489 = vld [vmem:[%s18 + $0x18] sm:$0xff]
      %v2490 = vld [vmem:[%s18 + $0x20] sm:$0xff]
      %v2491 = vld [vmem:[%s18 + $0x28] sm:$0xff]
      %v2492 = vld [vmem:[%s18 + $0x30] sm:$0xff]
      %v2493 = vld [vmem:[%s18 + $0x38] sm:$0xff]
      %v2494 = vld [vmem:[%s18 + $0x40] sm:$0xff]
      %v2495 = vld [vmem:[%s18 + $0x48] sm:$0xff]
      %v2496 = vld [vmem:[%s18 + $0x50] sm:$0xff]
      %v2497 = vld [vmem:[%s18 + $0x58] sm:$0xff]
      %v2498 = vld [vmem:[%s18 + $0x60] sm:$0xff]
      %v2499 = vld [vmem:[%s18 + $0x68] sm:$0xff]
      %v2500 = vld [vmem:[%s18 + $0x70] sm:$0xff]
      %v2501 = vld [vmem:[%s18 + $0x78] sm:$0xff]
      %v2502 = vld [vmem:[%s18 + $0x80] sm:$0xff]
      %v2503 = vld [vmem:[%s18 + $0x88] sm:$0xff]
      %v2504 = vld [vmem:[%s18 + $0x90] sm:$0xff]
      %v2505 = vld [vmem:[%s18 + $0x98] sm:$0xff]
      %v2506 = vld [vmem:[%s18 + $0xa0] sm:$0xff]
      %v2507 = vld [vmem:[%s18 + $0xa8] sm:$0xff]
      %v2508 = vld [vmem:[%s18 + $0xb0] sm:$0xff]
      %v2509 = vld [vmem:[%s18 + $0xb8] sm:$0xff]
      %v2510 = vld [vmem:[%s18 + $0xc0] sm:$0xff]
      %v2511 = vld [vmem:[%s18 + $0xc8] sm:$0xff]
      %v2512 = vld [vmem:[%s18 + $0xd0] sm:$0xff]
      %v2513 = vld [vmem:[%s18 + $0xd8] sm:$0xff]
      %v2514 = vld [vmem:[%s18 + $0xe0] sm:$0xff]
      %v2515 = vld [vmem:[%s18 + $0xe8] sm:$0xff]
      %v2516 = vld [vmem:[%s18 + $0xf0] sm:$0xff]
      %v2517 = vld [vmem:[%s18 + $0xf8] sm:$0xff]
      %v2518 = vld [vmem:[%s18 + $0x100] sm:$0xff]
      %v2519 = vld [vmem:[%s18 + $0x108] sm:$0xff]
      %v2520 = vld [vmem:[%s18 + $0x110] sm:$0xff]
      %v2521 = vld [vmem:[%s18 + $0x118] sm:$0xff]
      %v2522 = vld [vmem:[%s18 + $0x120] sm:$0xff]
      %v2523 = vld [vmem:[%s18 + $0x128] sm:$0xff]
      %v2524 = vld [vmem:[%s18 + $0x130] sm:$0xff]
      %v2525 = vld [vmem:[%s18 + $0x138] sm:$0xff]
      %v2526 = vld [vmem:[%s18 + $0x140] sm:$0xff]
      %v2527 = vld [vmem:[%s18 + $0x148] sm:$0xff]
      %v2528 = vld [vmem:[%s18 + $0x150] sm:$0xff]
      %v2529 = vld [vmem:[%s18 + $0x158] sm:$0xff]
      %v2530 = vld [vmem:[%s18 + $0x160] sm:$0xff]
      %v2531 = vld [vmem:[%s18 + $0x168] sm:$0xff]
      %v2532 = vld [vmem:[%s18 + $0x170] sm:$0xff]
      %v2533 = vld [vmem:[%s18 + $0x178] sm:$0xff]
      %v2534 = vld [vmem:[%s18 + $0x180] sm:$0xff]
      %v2535 = vld [vmem:[%s18 + $0x188] sm:$0xff]
      %v2536 = vld [vmem:[%s18 + $0x190] sm:$0xff]
      %v2537 = vld [vmem:[%s18 + $0x198] sm:$0xff]
      %v2538 = vld [vmem:[%s18 + $0x1a0] sm:$0xff]
      %v2539 = vld [vmem:[%s18 + $0x1a8] sm:$0xff]
      %v2540 = vld [vmem:[%s18 + $0x1b0] sm:$0xff]
      %v2541 = vld [vmem:[%s18 + $0x1b8] sm:$0xff]
      %v2542 = vld [vmem:[%s18 + $0x1c0] sm:$0xff]
      %v2543 = vld [vmem:[%s18 + $0x1c8] sm:$0xff]
      %v2544 = vld [vmem:[%s18 + $0x1d0] sm:$0xff]
      %v2545 = vld [vmem:[%s18 + $0x1d8] sm:$0xff]
      %v2546 = vld [vmem:[%s18 + $0x1e0] sm:$0xff]
      %v2547 = vld [vmem:[%s18 + $0x1e8] sm:$0xff]
      %v2548 = vld [vmem:[%s18 + $0x1f0] sm:$0xff]
      %v2549 = vld [vmem:[%s18 + $0x1f8] sm:$0xff]
      %v2550 = vld [vmem:[%s19] sm:$0xff]
      %v2551 = vld [vmem:[%s19 + $0x8] sm:$0xff]
      %v2552 = vld [vmem:[%s19 + $0x10] sm:$0xff]
      %v2553 = vld [vmem:[%s19 + $0x18] sm:$0xff]
      %v2554 = vld [vmem:[%s19 + $0x20] sm:$0xff]
      %v2555 = vld [vmem:[%s19 + $0x28] sm:$0xff]
      %v2556 = vld [vmem:[%s19 + $0x30] sm:$0xff]
      %v2557 = vld [vmem:[%s19 + $0x38] sm:$0xff]
      %v2558 = vld [vmem:[%s19 + $0x40] sm:$0xff]
      %v2559 = vld [vmem:[%s19 + $0x48] sm:$0xff]
      %v2560 = vld [vmem:[%s19 + $0x50] sm:$0xff]
      %v2561 = vld [vmem:[%s19 + $0x58] sm:$0xff]
      %v2562 = vld [vmem:[%s19 + $0x60] sm:$0xff]
      %v2563 = vld [vmem:[%s19 + $0x68] sm:$0xff]
      %v2564 = vld [vmem:[%s19 + $0x70] sm:$0xff]
      %v2565 = vld [vmem:[%s19 + $0x78] sm:$0xff]
      %v2566 = vld [vmem:[%s19 + $0x80] sm:$0xff]
      %v2567 = vld [vmem:[%s19 + $0x88] sm:$0xff]
      %v2568 = vld [vmem:[%s19 + $0x90] sm:$0xff]
      %v2569 = vld [vmem:[%s19 + $0x98] sm:$0xff]
      %v2570 = vld [vmem:[%s19 + $0xa0] sm:$0xff]
      %v2571 = vld [vmem:[%s19 + $0xa8] sm:$0xff]
      %v2572 = vld [vmem:[%s19 + $0xb0] sm:$0xff]
      %v2573 = vld [vmem:[%s19 + $0xb8] sm:$0xff]
      %v2574 = vld [vmem:[%s19 + $0xc0] sm:$0xff]
      %v2575 = vld [vmem:[%s19 + $0xc8] sm:$0xff]
      %v2576 = vld [vmem:[%s19 + $0xd0] sm:$0xff]
      %v2577 = vld [vmem:[%s19 + $0xd8] sm:$0xff]
      %v2578 = vld [vmem:[%s19 + $0xe0] sm:$0xff]
      %v2579 = vld [vmem:[%s19 + $0xe8] sm:$0xff]
      %v2580 = vld [vmem:[%s19 + $0xf0] sm:$0xff]
      %v2581 = vld [vmem:[%s19 + $0xf8] sm:$0xff]
      %2582 = vmatprep.subr.mxu0 %v2551
      %2583 = vmatpush1.msra.mxu0 %v2550
      %2584 = vmatprep.subr.mxu0 %v2553
      %2585 = vmatpush1.msra.mxu0 %v2552
      %2586 = vmatprep.subr.mxu0 %v2555
      %2587 = vmatpush1.msra.mxu0 %v2554
      %2588 = vmatprep.subr.mxu0 %v2557
      %2589 = vmatpush1.msra.mxu0 %v2556
      %2590 = vmatprep.subr.mxu0 %v2559
      %2591 = vmatpush1.msra.mxu0 %v2558
      %2592 = vmatprep.subr.mxu0 %v2561
      %2593 = vmatpush1.msra.mxu0 %v2560
      %2594 = vmatprep.subr.mxu0 %v2563
      %2595 = vmatpush1.msra.mxu0 %v2562
      %2596 = vmatprep.subr.mxu0 %v2565
      %2597 = vmatpush1.msra.mxu0 %v2564
      %2598 = vmatprep.subr.mxu0 %v2567
      %2599 = vmatpush1.msra.mxu0 %v2566
      %2600 = vmatprep.subr.mxu0 %v2569
      %2601 = vmatpush1.msra.mxu0 %v2568
      %2602 = vmatprep.subr.mxu0 %v2571
      %2603 = vmatpush1.msra.mxu0 %v2570
      %2604 = vmatprep.subr.mxu0 %v2573
      %2605 = vmatpush1.msra.mxu0 %v2572
      %2606 = vmatprep.subr.mxu0 %v2575
      %2607 = vmatpush1.msra.mxu0 %v2574
      %2608 = vmatprep.subr.mxu0 %v2577
      %2609 = vmatpush1.msra.mxu0 %v2576
      %2610 = vmatprep.subr.mxu0 %v2579
      %2611 = vmatpush1.msra.mxu0 %v2578
      %2612 = vmatprep.subr.mxu0 %v2581
      %2613 = vmatpush1.msra.mxu0 %v2580
      %2614 = vmatprep.subr.mxu0 0.0
      %2615 = vmatpush1.msra.mxu0 0.0
      %2616 = vmatprep.subr.mxu0 0.0
      %2617 = vmatpush1.msra.mxu0 0.0
      %2618 = vmatprep.subr.mxu0 0.0
      %2619 = vmatpush1.msra.mxu0 0.0
      %2620 = vmatprep.subr.mxu0 0.0
      %2621 = vmatpush1.msra.mxu0 0.0
      %2622 = vmatprep.subr.mxu0 0.0
      %2623 = vmatpush1.msra.mxu0 0.0
      %2624 = vmatprep.subr.mxu0 0.0
      %2625 = vmatpush1.msra.mxu0 0.0
      %2626 = vmatprep.subr.mxu0 0.0
      %2627 = vmatpush1.msra.mxu0 0.0
      %2628 = vmatprep.subr.mxu0 0.0
      %2629 = vmatpush1.msra.mxu0 0.0
      %2630 = vmatprep.subr.mxu0 0.0
      %2631 = vmatpush1.msra.mxu0 0.0
      %2632 = vmatprep.subr.mxu0 0.0
      %2633 = vmatpush1.msra.mxu0 0.0
      %2634 = vmatprep.subr.mxu0 0.0
      %2635 = vmatpush1.msra.mxu0 0.0
      %2636 = vmatprep.subr.mxu0 0.0
      %2637 = vmatpush1.msra.mxu0 0.0
      %2638 = vmatprep.subr.mxu0 0.0
      %2639 = vmatpush1.msra.mxu0 0.0
      %2640 = vmatprep.subr.mxu0 0.0
      %2641 = vmatpush1.msra.mxu0 0.0
      %2642 = vmatprep.subr.mxu0 0.0
      %2643 = vmatpush1.msra.mxu0 0.0
      %2644 = vmatprep.subr.mxu0 0.0
      %2645 = vmatpush1.msra.mxu0 0.0
      %2646 = vmatprep.mubr.f32.mxu0 0.0
      %2647 = vmatmul.mubr.f32.gmra.mrb[0].mxu0 %v2485
      %v2648 = vpop.f32.mrb[0].mxu0
      %v2649 = vadd.f32 0.0, %v2648
      %v2650 = vpop.f32.mrb[0].mxu0
      %v2651 = vadd.f32 0.0, %v2650
      %2652 = vdwg.mxu0
      %2653 = vmatprep.subr.mxu0 %v2487
      %2654 = vmatpush1.msra.mxu0 %v2486
      %2655 = vmatprep.subr.mxu0 %v2489
      %2656 = vmatpush1.msra.mxu0 %v2488
      %2657 = vmatprep.subr.mxu0 %v2491
      %2658 = vmatpush1.msra.mxu0 %v2490
      %2659 = vmatprep.subr.mxu0 %v2493
      %2660 = vmatpush1.msra.mxu0 %v2492
      %2661 = vmatprep.subr.mxu0 %v2495
      %2662 = vmatpush1.msra.mxu0 %v2494
      %2663 = vmatprep.subr.mxu0 %v2497
      %2664 = vmatpush1.msra.mxu0 %v2496
      %2665 = vmatprep.subr.mxu0 %v2499
      %2666 = vmatpush1.msra.mxu0 %v2498
      %2667 = vmatprep.subr.mxu0 %v2501
      %2668 = vmatpush1.msra.mxu0 %v2500
      %2669 = vmatprep.subr.mxu0 %v2503
      %2670 = vmatpush1.msra.mxu0 %v2502
      %2671 = vmatprep.subr.mxu0 %v2505
      %2672 = vmatpush1.msra.mxu0 %v2504
      %2673 = vmatprep.subr.mxu0 %v2507
      %2674 = vmatpush1.msra.mxu0 %v2506
      %2675 = vmatprep.subr.mxu0 %v2509
      %2676 = vmatpush1.msra.mxu0 %v2508
      %2677 = vmatprep.subr.mxu0 %v2511
      %2678 = vmatpush1.msra.mxu0 %v2510
      %2679 = vmatprep.subr.mxu0 %v2513
      %2680 = vmatpush1.msra.mxu0 %v2512
      %2681 = vmatprep.subr.mxu0 %v2515
      %2682 = vmatpush1.msra.mxu0 %v2514
      %2683 = vmatprep.subr.mxu0 %v2517
      %2684 = vmatpush1.msra.mxu0 %v2516
      %2685 = vmatprep.subr.mxu0 %v2519
      %2686 = vmatpush1.msra.mxu0 %v2518
      %2687 = vmatprep.subr.mxu0 %v2521
      %2688 = vmatpush1.msra.mxu0 %v2520
      %2689 = vmatprep.subr.mxu0 %v2523
      %2690 = vmatpush1.msra.mxu0 %v2522
      %2691 = vmatprep.subr.mxu0 %v2525
      %2692 = vmatpush1.msra.mxu0 %v2524
      %2693 = vmatprep.subr.mxu0 %v2527
      %2694 = vmatpush1.msra.mxu0 %v2526
      %2695 = vmatprep.subr.mxu0 %v2529
      %2696 = vmatpush1.msra.mxu0 %v2528
      %2697 = vmatprep.subr.mxu0 %v2531
      %2698 = vmatpush1.msra.mxu0 %v2530
      %2699 = vmatprep.subr.mxu0 %v2533
      %2700 = vmatpush1.msra.mxu0 %v2532
      %2701 = vmatprep.subr.mxu0 %v2535
      %2702 = vmatpush1.msra.mxu0 %v2534
      %2703 = vmatprep.subr.mxu0 %v2537
      %2704 = vmatpush1.msra.mxu0 %v2536
      %2705 = vmatprep.subr.mxu0 %v2539
      %2706 = vmatpush1.msra.mxu0 %v2538
      %2707 = vmatprep.subr.mxu0 %v2541
      %2708 = vmatpush1.msra.mxu0 %v2540
      %2709 = vmatprep.subr.mxu0 %v2543
      %2710 = vmatpush1.msra.mxu0 %v2542
      %2711 = vmatprep.subr.mxu0 %v2545
      %2712 = vmatpush1.msra.mxu0 %v2544
      %2713 = vmatprep.subr.mxu0 %v2547
      %2714 = vmatpush1.msra.mxu0 %v2546
      %2715 = vmatprep.subr.mxu0 %v2549
      %2716 = vmatpush1.msra.mxu0 %v2548
      %2717 = vmatprep.mubr.f32.mxu0 %v2159
      %2718 = vmatmul.mubr.f32.gmra.mrb[0].mxu0 %v2157
      %v2719 = vpop.f32.mrb[0].mxu0
      %v2720 = vadd.f32 %v2649, %v2719
      %v2721 = vpop.f32.mrb[0].mxu0
      %v2722 = vadd.f32 %v2651, %v2721
      %2723 = vdwg.mxu0
      %v2724 = vld [vmem:[%s20] sm:$0x3]
      %v2726 = vlaneseq
      %v2727 = vshrl.u32 %v2726, 7
      %v2728 = vsub.s32 0, %v2727
      %v2729 = vrot.slane %v2724, %v2728
      %v2730 = vlaneseq
      %v2731 = vshrl.u32 %v2730, 7
      %v2732 = vsub.s32 1, %v2731
      %v2733 = vrot.slane %v2724, %v2732
      %v2736 = vadd.f32 %v2720, %v2729
      %v2737 = vadd.f32 %v2722, %v2733
      %v2738 = vld [vmem:[%s21] sm:$0x3]
      %v2739 = vld [vmem:[%s22] sm:$0x3]
      %v2740 = vsel %vm2255, %v2736, 0.0
      %v2741 = vsel %vm2255, %v2737, 0.0
      %v2742 = vadd.f32 %v2740, %v2741
      %2743 = vadd.xlane.f32.xlu0 %v2742
      %v2744 = vpop.xlane.xlu0 %2743
      %v2745 = vrcp.pop 256.0
      %v2746 = vmul.f32 %v2744, %v2745
      %v2747 = vsub.f32 %v2736, %v2746
      %v2748 = vsub.f32 %v2737, %v2746
      %v2749 = vmul.f32 %v2747, %v2747
      %v2750 = vmul.f32 %v2748, %v2748
      %v2751 = vsel %vm2255, %v2749, 0.0
      %v2752 = vsel %vm2255, %v2750, 0.0
      %v2753 = vadd.f32 %v2751, %v2752
      %2754 = vadd.xlane.f32.xlu0 %v2753
      %v2755 = vpop.xlane.xlu0 %2754
      %v2756 = vmul.f32 %v2755, %v2745
      %v2757 = vadd.f32 %v2756, 1e-05
      %v2758 = vrsqrt.pop %v2757
      %v2759 = vmul.f32 %v2747, %v2758
      %v2760 = vmul.f32 %v2748, %v2758
      %v2762 = vlaneseq
      %v2763 = vshrl.u32 %v2762, 7
      %v2764 = vsub.s32 0, %v2763
      %v2765 = vrot.slane %v2738, %v2764
      %v2766 = vlaneseq
      %v2767 = vshrl.u32 %v2766, 7
      %v2768 = vsub.s32 1, %v2767
      %v2769 = vrot.slane %v2738, %v2768
      %v2772 = vmul.f32 %v2759, %v2765
      %v2773 = vmul.f32 %v2760, %v2769
      %v2775 = vlaneseq
      %v2776 = vshrl.u32 %v2775, 7
      %v2777 = vsub.s32 0, %v2776
      %v2778 = vrot.slane %v2739, %v2777
      %v2779 = vlaneseq
      %v2780 = vshrl.u32 %v2779, 7
      %v2781 = vsub.s32 1, %v2780
      %v2782 = vrot.slane %v2739, %v2781
      %v2785 = vadd.f32 %v2772, %v2778
      %v2786 = vadd.f32 %v2773, %v2782
      %v2787 = vmax.f32 %v2785, 0.0
      %v2788 = vmax.f32 %v2786, 0.0
      %v2789 = vld [vmem:[%s23] sm:$0x3]
      %v2791 = vlaneseq
      %v2792 = vshrl.u32 %v2791, 7
      %v2793 = vsub.s32 0, %v2792
      %v2794 = vrot.slane %v2789, %v2793
      %v2795 = vlaneseq
      %v2796 = vshrl.u32 %v2795, 7
      %v2797 = vsub.s32 1, %v2796
      %v2798 = vrot.slane %v2789, %v2797
      %v2801 = vmul.f32 %v2787, %v2794
      %v2802 = vmul.f32 %v2788, %v2798
      %v2803 = vsel %vm2255, %v2801, 0.0
      %v2804 = vsel %vm2255, %v2802, 0.0
      %v2805 = vadd.f32 %v2803, %v2804
      %2806 = vadd.xlane.f32.xlu0 %v2805
      %v2807 = vpop.xlane.xlu0 %2806
      %v2808 = vld [vmem:[#allocation2] sm:$0x1]
      %v2809 = vadd.f32 %v2807, %v2808
      %vm2810 = vcmask 0
      %2811 = vst.msk [vmem:[%s776] sm:$0x1] %vm2810, %v2809
      %p2812 = scmp.lt.s32.totalorder %s38, 1
      %s2813 = scalar_select %p2812, %s38, 1
      %s2814 = scalar_lea.vmem %s25, %s2813
      // Predicated region
      $region121: #{model_forward.1} parent=119 // pred_check
        %p2815 = pneg %p591
      $region122: #{model_forward.1} parent=119 // pred_check_branch
        %2817 = sbr.rel (%p2815) target = $region124
      $region123: #{model_forward.1} parent=119 // pred_region
        _
      $region124: #{model_forward.1} parent=119 // pred_fallthru
        _
    $region120: #{model_forward.1} parent=5 // pred_fallthru
      _
    %p2818 = scmp.le.s32.totalorder 2, %s33
    // Predicated region
    $region125: #{model_forward.1} parent=5 // pred_check
      %p2819 = pneg %p2818
    $region126: #{model_forward.1} parent=5 // pred_check_branch
      %2821 = sbr.rel (%p2819) target = $region128
    $region127: #{model_forward.1} parent=5 // pred_region
      %s2822 = ssub.s32 %s33, 2
      // Predicated region
      $region129: #{model_forward.1} parent=127 // pred_check
        %p2823 = pneg %p597
      $region130: #{model_forward.1} parent=127 // pred_check_branch
        %2825 = sbr.rel (%p2823) target = $region132
      $region131: #{model_forward.1} parent=127 // pred_region
        %p2826 = scmp.lt.s32.totalorder %s39, 1
        %s2827 = scalar_select %p2826, %s39, 1
        %s2828 = scalar_lea.vmem %s25, %s2827
      $region132: #{model_forward.1} parent=127 // pred_fallthru
        _
    $region128: #{model_forward.1} parent=5 // pred_fallthru
      _
  $region6: #{model_forward.1} parent=0 // loop_footer
    %s37 = sadd.s32 1, %s33
  $region7: #{model_forward.1} parent=0 // loop_footer_branch
    %32 = sbr.rel target = $region3
  $region8: #{model_forward.1} parent=0 // loop_exit
    _

</llo_original>
